<compile_context>
chip_gen: v5e
topology: v5e:2x2
jax: 0.10.0
libtpu: 0.0.40
codegen_flags: <defaults>
</compile_context>

<pallas_src>
import jax
import jax.numpy as jnp
from jax import lax
from jax.experimental import pallas as pl
from jax.experimental.pallas import tpu as pltpu


_LANE = 128
_SUBLANE_BF16 = 16  # bf16 packs 2 rows per sublane -> keep tiles 16-row aligned


def _round_up(x, m):
    return ((x + m - 1) // m) * m


def rnn_classifier_kernel(tile_max_ref,                      # scalar prefetch (SMEM)
                          emb_ref, len_ref,
                          wih_f_ref, whh_f_ref, bgi_f_ref, bhn_f_ref,
                          wih_b_ref, whh_b_ref, bgi_b_ref, bhn_b_ref,
                          wfc_b_ref, wfc_f_ref, bfc_ref,
                          out_ref,
                          gi_f_ref, gi_b_ref, hf_ref, hb_ref):
    BT, Hp = hf_ref.shape
    T = gi_f_ref.shape[0]
    cdt = gi_f_ref.dtype

    # ---- hoisted input projection: one big MXU matmul per direction --------
    # (T, BT, Hp) -> (T*BT, Hp); BT % 16 == 0 keeps this collapse tile-aligned.
    x_all = emb_ref[...].reshape(T * BT, Hp)
    gi_f = jnp.dot(x_all, wih_f_ref[...],
                   preferred_element_type=jnp.float32) + bgi_f_ref[...]
    gi_f_ref[...] = gi_f.astype(cdt).reshape(T, BT, 3 * Hp)
    gi_b = jnp.dot(x_all, wih_b_ref[...],
                   preferred_element_type=jnp.float32) + bgi_b_ref[...]
    gi_b_ref[...] = gi_b.astype(cdt).reshape(T, BT, 3 * Hp)

    # hidden = zeros(n_layers * n_directions, B, H)
    hf_ref[...] = jnp.zeros_like(hf_ref)
    hb_ref[...] = jnp.zeros_like(hb_ref)

    lengths = len_ref[...]                                   # (BT, 1) int32
    t_max = tile_max_ref[pl.program_id(0)]                   # per-tile max seq len

    def cell(gi, h, whh_ref, bhn_ref, keep):
        # Only h @ W_hh stays on the sequential critical path; b_hh[r|z] was
        # folded into gi, b_hh[n] must stay inside the r*(.) term.
        gh = jnp.dot(h.astype(whh_ref.dtype), whh_ref[...],
                     preferred_element_type=jnp.float32)
        r = jax.nn.sigmoid(gi[:, 0:Hp] + gh[:, 0:Hp])
        z = jax.nn.sigmoid(gi[:, Hp:2 * Hp] + gh[:, Hp:2 * Hp])
        n = jnp.tanh(gi[:, 2 * Hp:] + r * (gh[:, 2 * Hp:] + bhn_ref[...]))
        h_new = (1.0 - z) * n + z * h
        # pack_padded_sequence semantics: only update while t < seq_len[b].
        return jnp.where(keep, h_new, h)

    def step(t, carry):
        # forward direction: original timestep t
        hf_ref[...] = cell(gi_f_ref[t], hf_ref[...],
                           whh_f_ref, bhn_f_ref, lengths > t)
        # backward direction: original timestep t_max-1-t  (all timesteps
        # >= t_max are fully masked, so skipping them is exact since h0 == 0).
        tb = t_max - 1 - t
        hb_ref[...] = cell(gi_b_ref[tb], hb_ref[...],
                           whh_b_ref, bhn_b_ref, lengths > tb)
        return carry

    lax.fori_loop(0, t_max, step, 0)

    # torch: cat([hidden[-1], hidden[-2]], 1) @ fc_w + fc_b
    #      == hb @ fc_w[:H] + hf @ fc_w[H:] + fc_b   (no lane-axis concat)
    out_ref[...] = (jnp.dot(hb_ref[...], wfc_b_ref[...],
                            preferred_element_type=jnp.float32)
                    + jnp.dot(hf_ref[...], wfc_f_ref[...],
                              preferred_element_type=jnp.float32)
                    + bfc_ref[...])


def rnn_classifier_forward(tokens, seq_lengths, params,
                           compute_dtype=jnp.bfloat16):
    emb_table = params['embedding']                          # (V, H) f32
    H = emb_table.shape[1]
    B, T = tokens.shape
    O = params['fc_w'].shape[1]

    Hp = _round_up(H, _LANE)                 # lane-aligned hidden size
    Op = _round_up(O, _LANE)                 # lane-dense output store
    BT = min(128, _round_up(B, _SUBLANE_BF16))
    Bp = _round_up(B, BT)
    nb = Bp // BT
    cbytes = jnp.dtype(compute_dtype).itemsize

    # ---- glue (plain XLA): input.t() + embedding gather, pad, no transpose --
    table_p = jnp.pad(emb_table, ((0, 0), (0, Hp - H))).astype(compute_dtype)
    emb = jnp.take(table_p, tokens.T, axis=0)                # (T, B, Hp)
    emb = jnp.pad(emb, ((0, 0), (0, Bp - B), (0, 0)))        # (T, Bp, Hp)

    # seq_lengths replaces any dense mask; padded rows get length 0.
    lengths = jnp.pad(seq_lengths.astype(jnp.int32), (0, Bp - B))
    lengths_v = lengths.reshape(Bp, 1)
    tile_max = lengths.reshape(nb, BT).max(axis=1).astype(jnp.int32)   # (nb,)

    def pad_gates(w, rows_out, dtype):
        # (rows, 3H) gate order [r, z, n] -> (rows_out, 3*Hp); each gate block
        # padded to a 128-lane boundary with zeros so the padded hidden lanes
        # stay exactly zero through the recurrence.
        rows = w.shape[0]
        blocks = [jnp.pad(w[:, k * H:(k + 1) * H],
                          ((0, rows_out - rows), (0, Hp - H))) for k in range(3)]
        return jnp.concatenate(blocks, axis=1).astype(dtype)

    def fold_bias(bih, bhh):
        # gi bias = b_ih + b_hh for the r/z gates (their b_hh is additive with
        # gi); the n-gate b_hh must stay inside r*(h@W_hn + b_hn).
        def pad1(v):
            return jnp.pad(v, ((0, 0), (0, Hp - H)))
        bgi = jnp.concatenate([pad1(bih[:, 0:H] + bhh[:, 0:H]),
                               pad1(bih[:, H:2 * H] + bhh[:, H:2 * H]),
                               pad1(bih[:, 2 * H:])], axis=1).astype(jnp.float32)
        bhn = pad1(bhh[:, 2 * H:]).astype(jnp.float32)
        return bgi, bhn

    wih_f = pad_gates(params['wih_f'], Hp, compute_dtype)
    whh_f = pad_gates(params['whh_f'], Hp, compute_dtype)
    wih_b = pad_gates(params['wih_b'], Hp, compute_dtype)
    whh_b = pad_gates(params['whh_b'], Hp, compute_dtype)
    bgi_f, bhn_f = fold_bias(params['bih_f'], params['bhh_f'])
    bgi_b, bhn_b = fold_bias(params['bih_b'], params['bhh_b'])

    fc_w = params['fc_w']                                    # (2H, O)
    wfc_b = jnp.pad(fc_w[:H], ((0, Hp - H), (0, Op - O))).astype(jnp.float32)
    wfc_f = jnp.pad(fc_w[H:], ((0, Hp - H), (0, Op - O))).astype(jnp.float32)
    bfc = jnp.pad(params['fc_b'], ((0, 0), (0, Op - O))).astype(jnp.float32)

    in_arrays = [emb, lengths_v,
                 wih_f, whh_f, bgi_f, bhn_f,
                 wih_b, whh_b, bgi_b, bhn_b,
                 wfc_b, wfc_f, bfc]

    def rep(a):  # replicated (same full block for every batch-tile program)
        n = a.ndim
        return pl.BlockSpec(a.shape, lambda i, mx, _n=n: (0,) * _n)

    in_specs = ([pl.BlockSpec((T, BT, Hp), lambda i, mx: (0, i, 0)),
                 pl.BlockSpec((BT, 1), lambda i, mx: (i, 0))]
                + [rep(a) for a in in_arrays[2:]])

    # ---- cost / VMEM accounting --------------------------------------------
    flops = int(2 * 2 * T * Bp * Hp * 3 * Hp          # hoisted input projections
                + 2 * 2 * T * Bp * Hp * 3 * Hp        # recurrent h @ W_hh
                + 2 * 2 * Bp * Hp * Op)               # final FC (two halves)
    transcendentals = int(2 * T * Bp * 3 * Hp)
    weight_bytes = (cbytes * 4 * Hp * 3 * Hp
                    + 4 * (2 * 3 * Hp + 2 * Hp + 2 * Hp * Op + Op))
    bytes_accessed = int(cbytes * T * Bp * Hp + 4 * (Bp + Bp * Op) + weight_bytes)

    vmem_need = (2 * cbytes * T * BT * Hp             # emb block (double-buffered)
                 + 2 * cbytes * T * BT * 3 * Hp       # gi scratches (both dirs)
                 + 4 * T * BT * 3 * Hp                # f32 projection temporary
                 + 2 * 4 * BT * Hp                    # h carries
                 + weight_bytes
                 + 2 * 4 * BT * Op + 2 * 4 * BT)      # out + lengths blocks
    try:
        vmem_cap = pltpu.get_tpu_info().vmem_capacity_bytes
    except Exception:
        vmem_cap = 64 * 1024 * 1024
    # Leave Mosaic headroom: never request the full physical VMEM (esp. v7x's
    # 64 MiB); allow >64 MiB on v5e/v6e (128 MiB physical).
    vmem_limit = int(min(max(2 * vmem_need, 32 * 1024 * 1024),
                         int(0.82 * vmem_cap)))

    out = pl.pallas_call(
        rnn_classifier_kernel,
        out_shape=jax.ShapeDtypeStruct((Bp, Op), jnp.float32),
        grid_spec=pltpu.PrefetchScalarGridSpec(
            num_scalar_prefetch=1,                    # per-tile max seq length
            grid=(nb,),
            in_specs=in_specs,
            out_specs=pl.BlockSpec((BT, Op), lambda i, mx: (i, 0)),
            scratch_shapes=[pltpu.VMEM((T, BT, 3 * Hp), compute_dtype),  # gi fwd
                            pltpu.VMEM((T, BT, 3 * Hp), compute_dtype),  # gi bwd
                            pltpu.VMEM((BT, Hp), jnp.float32),           # h fwd
                            pltpu.VMEM((BT, Hp), jnp.float32)]),         # h bwd
        compiler_params=pltpu.CompilerParams(
            dimension_semantics=("parallel",),        # batch tiles -> 2 TCs on v7x
            vmem_limit_bytes=vmem_limit),
        cost_estimate=pl.CostEstimate(flops=flops,
                                      transcendentals=transcendentals,
                                      bytes_accessed=bytes_accessed),
    )(tile_max, *in_arrays)

    return out[:B, :O]


def init_params(key, vocab, H, O):
    ks = jax.random.split(key, 11)
    s = 1.0 / float(jnp.sqrt(jnp.float32(H)))

    def u(k, shape):
        return jax.random.uniform(k, shape, jnp.float32, -s, s)

    return dict(
        embedding=jax.random.normal(ks[0], (vocab, H), jnp.float32),
        # GRU weights stored transposed: (in, 3H), gate order [r, z, n]
        wih_f=u(ks[1], (H, 3 * H)), whh_f=u(ks[2], (H, 3 * H)),
        bih_f=u(ks[3], (1, 3 * H)), bhh_f=u(ks[4], (1, 3 * H)),
        wih_b=u(ks[5], (H, 3 * H)), whh_b=u(ks[6], (H, 3 * H)),
        bih_b=u(ks[7], (1, 3 * H)), bhh_b=u(ks[8], (1, 3 * H)),
        fc_w=u(ks[9], (2 * H, O)), fc_b=u(ks[10], (1, O)),
    )


def reference_forward(tokens, seq_lengths, params):
    """Plain-JAX f32 reference mirroring the PyTorch forward semantics."""
    H = params['embedding'].shape[1]
    B, T = tokens.shape
    emb = jnp.take(params['embedding'], tokens.T, axis=0)    # (T, B, H)
    mask = (jnp.arange(T)[:, None] < seq_lengths[None, :]).astype(jnp.float32)

    def cell(x, h, m, wih, whh, bih, bhh):
        gi = x @ wih + bih
        gh = h @ whh + bhh
        r = jax.nn.sigmoid(gi[:, :H] + gh[:, :H])
        z = jax.nn.sigmoid(gi[:, H:2 * H] + gh[:, H:2 * H])
        n = jnp.tanh(gi[:, 2 * H:] + r * gh[:, 2 * H:])
        hn = (1.0 - z) * n + z * h
        m = m[:, None]
        return m * hn + (1.0 - m) * h

    hf = jnp.zeros((B, H), jnp.float32)
    hb = jnp.zeros((B, H), jnp.float32)
    for t in range(T):
        hf = cell(emb[t], hf, mask[t],
                  params['wih_f'], params['whh_f'], params['bih_f'], params['bhh_f'])
        tb = T - 1 - t
        hb = cell(emb[tb], hb, mask[tb],
                  params['wih_b'], params['whh_b'], params['bih_b'], params['bhh_b'])
    hidden_cat = jnp.concatenate([hb, hf], axis=1)
    return hidden_cat @ params['fc_w'] + params['fc_b']


if __name__ == "__main__":
    VOCAB, HIDDEN, OUTPUT = 16, 32, 4
    B, T = 8, 8

    key = jax.random.PRNGKey(0)
    k_tok, k_par = jax.random.split(key)
    tokens = jax.random.randint(k_tok, (B, T), 0, VOCAB, dtype=jnp.int32)
    # pack_padded_sequence (enforce_sorted=True) requires descending lengths
    seq_lengths = jnp.array([8, 8, 7, 6, 5, 4, 3, 2], dtype=jnp.int32)

    params = init_params(k_par, VOCAB, HIDDEN, OUTPUT)

    out = rnn_classifier_forward(tokens, seq_lengths, params)
    out = jax.block_until_ready(out)

    ref = reference_forward(tokens, seq_lengths, params)
    assert out.shape == (B, OUTPUT)
    # bf16 emb/W_ih/W_hh streaming with f32 accumulation / f32 h carry.
    assert jnp.allclose(out, ref, atol=2.5e-2, rtol=2.5e-2), (out, ref)

    print("KERNEL_OK")
</pallas_src>

<mosaic_0001>
module attributes {stable_mosaic.version = 11 : i64} {
  func.func @rnn_classifier_kernel(%arg0: i32, %arg1: memref<1xi32, #tpu.memory_space<smem>>, %arg2: memref<8x16x128xbf16, #tpu.memory_space<vmem>>, %arg3: memref<16x1xi32, #tpu.memory_space<vmem>>, %arg4: memref<128x384xbf16, #tpu.memory_space<vmem>>, %arg5: memref<128x384xbf16, #tpu.memory_space<vmem>>, %arg6: memref<1x384xf32, #tpu.memory_space<vmem>>, %arg7: memref<1x128xf32, #tpu.memory_space<vmem>>, %arg8: memref<128x384xbf16, #tpu.memory_space<vmem>>, %arg9: memref<128x384xbf16, #tpu.memory_space<vmem>>, %arg10: memref<1x384xf32, #tpu.memory_space<vmem>>, %arg11: memref<1x128xf32, #tpu.memory_space<vmem>>, %arg12: memref<128x128xf32, #tpu.memory_space<vmem>>, %arg13: memref<128x128xf32, #tpu.memory_space<vmem>>, %arg14: memref<1x128xf32, #tpu.memory_space<vmem>>, %arg15: memref<16x128xf32, #tpu.memory_space<vmem>>, %arg16: memref<8x16x384xbf16, #tpu.memory_space<vmem>>, %arg17: memref<8x16x384xbf16, #tpu.memory_space<vmem>>, %arg18: memref<16x128xf32, #tpu.memory_space<vmem>>, %arg19: memref<16x128xf32, #tpu.memory_space<vmem>>) attributes {dimension_semantics = [#tpu.dimension_semantics<parallel>], iteration_bounds = array<i64: 1>, scalar_prefetch = 1 : i64, scratch_operands = 4 : i64, tpu.core_type = #tpu.core_type<tc>, window_params = [{transform_indices = @transform_0, window_bounds = array<i64: 8, 16, 128>}, {transform_indices = @transform_1, window_bounds = array<i64: 16, 1>}, {pipeline_mode = #tpu.pipeline_mode<synchronous>, transform_indices = @transform_2, window_bounds = array<i64: 128, 384>}, {pipeline_mode = #tpu.pipeline_mode<synchronous>, transform_indices = @transform_3, window_bounds = array<i64: 128, 384>}, {pipeline_mode = #tpu.pipeline_mode<synchronous>, transform_indices = @transform_4, window_bounds = array<i64: 1, 384>}, {pipeline_mode = #tpu.pipeline_mode<synchronous>, transform_indices = @transform_5, window_bounds = array<i64: 1, 128>}, {pipeline_mode = #tpu.pipeline_mode<synchronous>, transform_indices = @transform_6, window_bounds = array<i64: 128, 384>}, {pipeline_mode = #tpu.pipeline_mode<synchronous>, transform_indices = @transform_7, window_bounds = array<i64: 128, 384>}, {pipeline_mode = #tpu.pipeline_mode<synchronous>, transform_indices = @transform_8, window_bounds = array<i64: 1, 384>}, {pipeline_mode = #tpu.pipeline_mode<synchronous>, transform_indices = @transform_9, window_bounds = array<i64: 1, 128>}, {pipeline_mode = #tpu.pipeline_mode<synchronous>, transform_indices = @transform_10, window_bounds = array<i64: 128, 128>}, {pipeline_mode = #tpu.pipeline_mode<synchronous>, transform_indices = @transform_11, window_bounds = array<i64: 128, 128>}, {pipeline_mode = #tpu.pipeline_mode<synchronous>, transform_indices = @transform_12, window_bounds = array<i64: 1, 128>}, {transform_indices = @transform_13, window_bounds = array<i64: 16, 128>}]} {
    %c0 = arith.constant 0 : index
    %c0_0 = arith.constant 0 : index
    %c0_1 = arith.constant 0 : index
    %0 = vector.load %arg2[%c0, %c0_0, %c0_1] : memref<8x16x128xbf16, #tpu.memory_space<vmem>>, vector<8x16x128xbf16>
    %1 = vector.shape_cast %0 : vector<8x16x128xbf16> to vector<128x128xbf16>
    %c0_2 = arith.constant 0 : index
    %c0_3 = arith.constant 0 : index
    %2 = vector.load %arg4[%c0_2, %c0_3] : memref<128x384xbf16, #tpu.memory_space<vmem>>, vector<128x384xbf16>
    %cst = arith.constant dense<0.000000e+00> : vector<128x384xf32>
    %3 = tpu.matmul %1, %2, %cst {dimension_numbers = #tpu.dot_dimension_numbers<[1], [0], [0], [1], [0, 0, 1, 1], [], []>} : vector<128x128xbf16>, vector<128x384xbf16>, vector<128x384xf32> -> vector<128x384xf32>
    %c0_4 = arith.constant 0 : index
    %c0_5 = arith.constant 0 : index
    %4 = vector.load %arg6[%c0_4, %c0_5] : memref<1x384xf32, #tpu.memory_space<vmem>>, vector<1x384xf32>
    %5 = vector.broadcast %4 : vector<1x384xf32> to vector<128x384xf32>
    %6 = arith.addf %3, %5 : vector<128x384xf32>
    %7 = arith.truncf %6 : vector<128x384xf32> to vector<128x384xbf16>
    %8 = vector.shape_cast %7 : vector<128x384xbf16> to vector<8x16x384xbf16>
    %c0_6 = arith.constant 0 : index
    %c0_7 = arith.constant 0 : index
    %c0_8 = arith.constant 0 : index
    %9 = vector.load %arg16[%c0_6, %c0_7, %c0_8] : memref<8x16x384xbf16, #tpu.memory_space<vmem>>, vector<8x16x384xbf16>
    tpu.vector_store %arg16[%c0_6, %c0_7, %c0_8], %8 {strides = array<i32>} : memref<8x16x384xbf16, #tpu.memory_space<vmem>>, vector<8x16x384xbf16>,
    %c0_9 = arith.constant 0 : index
    %c0_10 = arith.constant 0 : index
    %10 = vector.load %arg8[%c0_9, %c0_10] : memref<128x384xbf16, #tpu.memory_space<vmem>>, vector<128x384xbf16>
    %cst_11 = arith.constant dense<0.000000e+00> : vector<128x384xf32>
    %11 = tpu.matmul %1, %10, %cst_11 {dimension_numbers = #tpu.dot_dimension_numbers<[1], [0], [0], [1], [0, 0, 1, 1], [], []>} : vector<128x128xbf16>, vector<128x384xbf16>, vector<128x384xf32> -> vector<128x384xf32>
    %c0_12 = arith.constant 0 : index
    %c0_13 = arith.constant 0 : index
    %12 = vector.load %arg10[%c0_12, %c0_13] : memref<1x384xf32, #tpu.memory_space<vmem>>, vector<1x384xf32>
    %13 = vector.broadcast %12 : vector<1x384xf32> to vector<128x384xf32>
    %14 = arith.addf %11, %13 : vector<128x384xf32>
    %15 = arith.truncf %14 : vector<128x384xf32> to vector<128x384xbf16>
    %16 = vector.shape_cast %15 : vector<128x384xbf16> to vector<8x16x384xbf16>
    %c0_14 = arith.constant 0 : index
    %c0_15 = arith.constant 0 : index
    %c0_16 = arith.constant 0 : index
    %17 = vector.load %arg17[%c0_14, %c0_15, %c0_16] : memref<8x16x384xbf16, #tpu.memory_space<vmem>>, vector<8x16x384xbf16>
    tpu.vector_store %arg17[%c0_14, %c0_15, %c0_16], %16 {strides = array<i32>} : memref<8x16x384xbf16, #tpu.memory_space<vmem>>, vector<8x16x384xbf16>,
    %cst_17 = arith.constant 0.000000e+00 : f32
    %18 = vector.broadcast %cst_17 : f32 to vector<16x128xf32>
    %c0_18 = arith.constant 0 : index
    %c0_19 = arith.constant 0 : index
    %19 = vector.load %arg18[%c0_18, %c0_19] : memref<16x128xf32, #tpu.memory_space<vmem>>, vector<16x128xf32>
    tpu.vector_store %arg18[%c0_18, %c0_19], %18 {strides = array<i32>} : memref<16x128xf32, #tpu.memory_space<vmem>>, vector<16x128xf32>,
    %cst_20 = arith.constant 0.000000e+00 : f32
    %20 = vector.broadcast %cst_20 : f32 to vector<16x128xf32>
    %c0_21 = arith.constant 0 : index
    %c0_22 = arith.constant 0 : index
    %21 = vector.load %arg19[%c0_21, %c0_22] : memref<16x128xf32, #tpu.memory_space<vmem>>, vector<16x128xf32>
    tpu.vector_store %arg19[%c0_21, %c0_22], %20 {strides = array<i32>} : memref<16x128xf32, #tpu.memory_space<vmem>>, vector<16x128xf32>,
    %c0_23 = arith.constant 0 : index
    %c0_24 = arith.constant 0 : index
    %22 = vector.load %arg3[%c0_23, %c0_24] : memref<16x1xi32, #tpu.memory_space<vmem>>, vector<16x1xi32>
    %23 = arith.index_cast %arg0 : i32 to index
    %24 = memref.load %arg1[%23] : memref<1xi32, #tpu.memory_space<smem>>
    %c0_i32 = arith.constant 0 : i32
    %c0_i32_25 = arith.constant 0 : i32
    %25 = arith.subi %24, %c0_i32_25 : i32
    %26 = arith.addi %c0_i32_25, %25 : i32
    %c1_i32 = arith.constant 1 : i32
    scf.for %arg20 = %c0_i32_25 to %26 step %c1_i32  : i32 {
      %38 = arith.index_cast %arg20 : i32 to index
      %c0_40 = arith.constant 0 : index
      %c0_41 = arith.constant 0 : index
      %39 = vector.load %arg16[%38, %c0_40, %c0_41] : memref<8x16x384xbf16, #tpu.memory_space<vmem>>, vector<1x16x384xbf16>
      %40 = vector.shape_cast %39 : vector<1x16x384xbf16> to vector<16x384xbf16>
      %c0_42 = arith.constant 0 : index
      %c0_43 = arith.constant 0 : index
      %41 = vector.load %arg18[%c0_42, %c0_43] : memref<16x128xf32, #tpu.memory_space<vmem>>, vector<16x128xf32>
      %42 = vector.broadcast %arg20 : i32 to vector<16x1xi32>
      %43 = arith.cmpi sgt, %22, %42 : vector<16x1xi32>
      %44 = arith.truncf %41 : vector<16x128xf32> to vector<16x128xbf16>
      %c0_44 = arith.constant 0 : index
      %c0_45 = arith.constant 0 : index
      %45 = vector.load %arg5[%c0_44, %c0_45] : memref<128x384xbf16, #tpu.memory_space<vmem>>, vector<128x384xbf16>
      %cst_46 = arith.constant dense<0.000000e+00> : vector<16x384xf32>
      %46 = tpu.matmul %44, %45, %cst_46 {dimension_numbers = #tpu.dot_dimension_numbers<[1], [0], [0], [1], [0, 0, 1, 1], [], []>} : vector<16x128xbf16>, vector<128x384xbf16>, vector<16x384xf32> -> vector<16x384xf32>
      %47 = vector.extract_strided_slice %40 {offsets = [0, 0], sizes = [16, 128], strides = [1, 1]} : vector<16x384xbf16> to vector<16x128xbf16>
      %48 = vector.extract_strided_slice %46 {offsets = [0, 0], sizes = [16, 128], strides = [1, 1]} : vector<16x384xf32> to vector<16x128xf32>
      %49 = arith.extf %47 : vector<16x128xbf16> to vector<16x128xf32>
      %50 = arith.addf %49, %48 : vector<16x128xf32>
      %51 = arith.negf %50 : vector<16x128xf32>
      %52 = math.exp %51 : vector<16x128xf32>
      %cst_47 = arith.constant 1.000000e+00 : f32
      %53 = vector.broadcast %cst_47 : f32 to vector<16x128xf32>
      %54 = arith.addf %53, %52 : vector<16x128xf32>
      %55 = arith.divf %53, %54 : vector<16x128xf32>
      %56 = vector.extract_strided_slice %40 {offsets = [0, 128], sizes = [16, 128], strides = [1, 1]} : vector<16x384xbf16> to vector<16x128xbf16>
      %57 = vector.extract_strided_slice %46 {offsets = [0, 128], sizes = [16, 128], strides = [1, 1]} : vector<16x384xf32> to vector<16x128xf32>
      %58 = arith.extf %56 : vector<16x128xbf16> to vector<16x128xf32>
      %59 = arith.addf %58, %57 : vector<16x128xf32>
      %60 = arith.negf %59 : vector<16x128xf32>
      %61 = math.exp %60 : vector<16x128xf32>
      %cst_48 = arith.constant 1.000000e+00 : f32
      %62 = vector.broadcast %cst_48 : f32 to vector<16x128xf32>
      %63 = arith.addf %62, %61 : vector<16x128xf32>
      %64 = arith.divf %62, %63 : vector<16x128xf32>
      %65 = vector.extract_strided_slice %40 {offsets = [0, 256], sizes = [16, 128], strides = [1, 1]} : vector<16x384xbf16> to vector<16x128xbf16>
      %66 = vector.extract_strided_slice %46 {offsets = [0, 256], sizes = [16, 128], strides = [1, 1]} : vector<16x384xf32> to vector<16x128xf32>
      %c0_49 = arith.constant 0 : index
      %c0_50 = arith.constant 0 : index
      %67 = vector.load %arg7[%c0_49, %c0_50] : memref<1x128xf32, #tpu.memory_space<vmem>>, vector<1x128xf32>
      %68 = vector.broadcast %67 : vector<1x128xf32> to vector<16x128xf32>
      %69 = arith.addf %66, %68 : vector<16x128xf32>
      %70 = arith.mulf %55, %69 : vector<16x128xf32>
      %71 = arith.extf %65 : vector<16x128xbf16> to vector<16x128xf32>
      %72 = arith.addf %71, %70 : vector<16x128xf32>
      %73 = math.tanh %72 : vector<16x128xf32>
      %cst_51 = arith.constant 1.000000e+00 : f32
      %74 = vector.broadcast %cst_51 : f32 to vector<16x128xf32>
      %75 = arith.subf %74, %64 : vector<16x128xf32>
      %76 = arith.mulf %75, %73 : vector<16x128xf32>
      %77 = arith.mulf %64, %41 : vector<16x128xf32>
      %78 = arith.addf %76, %77 : vector<16x128xf32>
      %79 = vector.shape_cast %43 : vector<16x1xi1> to vector<16x1xi1>
      %80 = vector.broadcast %79 : vector<16x1xi1> to vector<16x128xi1>
      %81 = arith.select %80, %78, %41 : vector<16x128xi1>, vector<16x128xf32>
      %c0_52 = arith.constant 0 : index
      %c0_53 = arith.constant 0 : index
      %82 = vector.load %arg18[%c0_52, %c0_53] : memref<16x128xf32, #tpu.memory_space<vmem>>, vector<16x128xf32>
      tpu.vector_store %arg18[%c0_52, %c0_53], %81 {strides = array<i32>} : memref<16x128xf32, #tpu.memory_space<vmem>>, vector<16x128xf32>,
      %c1_i32_54 = arith.constant 1 : i32
      %83 = arith.subi %24, %c1_i32_54 : i32
      %84 = arith.subi %83, %arg20 : i32
      %85 = arith.index_cast %84 : i32 to index
      %c0_55 = arith.constant 0 : index
      %c0_56 = arith.constant 0 : index
      %86 = vector.load %arg17[%85, %c0_55, %c0_56] : memref<8x16x384xbf16, #tpu.memory_space<vmem>>, vector<1x16x384xbf16>
      %87 = vector.shape_cast %86 : vector<1x16x384xbf16> to vector<16x384xbf16>
      %c0_57 = arith.constant 0 : index
      %c0_58 = arith.constant 0 : index
      %88 = vector.load %arg19[%c0_57, %c0_58] : memref<16x128xf32, #tpu.memory_space<vmem>>, vector<16x128xf32>
      %89 = vector.broadcast %84 : i32 to vector<16x1xi32>
      %90 = arith.cmpi sgt, %22, %89 : vector<16x1xi32>
      %91 = arith.truncf %88 : vector<16x128xf32> to vector<16x128xbf16>
      %c0_59 = arith.constant 0 : index
      %c0_60 = arith.constant 0 : index
      %92 = vector.load %arg9[%c0_59, %c0_60] : memref<128x384xbf16, #tpu.memory_space<vmem>>, vector<128x384xbf16>
      %cst_61 = arith.constant dense<0.000000e+00> : vector<16x384xf32>
      %93 = tpu.matmul %91, %92, %cst_61 {dimension_numbers = #tpu.dot_dimension_numbers<[1], [0], [0], [1], [0, 0, 1, 1], [], []>} : vector<16x128xbf16>, vector<128x384xbf16>, vector<16x384xf32> -> vector<16x384xf32>
      %94 = vector.extract_strided_slice %87 {offsets = [0, 0], sizes = [16, 128], strides = [1, 1]} : vector<16x384xbf16> to vector<16x128xbf16>
      %95 = vector.extract_strided_slice %93 {offsets = [0, 0], sizes = [16, 128], strides = [1, 1]} : vector<16x384xf32> to vector<16x128xf32>
      %96 = arith.extf %94 : vector<16x128xbf16> to vector<16x128xf32>
      %97 = arith.addf %96, %95 : vector<16x128xf32>
      %98 = arith.negf %97 : vector<16x128xf32>
      %99 = math.exp %98 : vector<16x128xf32>
      %cst_62 = arith.constant 1.000000e+00 : f32
      %100 = vector.broadcast %cst_62 : f32 to vector<16x128xf32>
      %101 = arith.addf %100, %99 : vector<16x128xf32>
      %102 = arith.divf %100, %101 : vector<16x128xf32>
      %103 = vector.extract_strided_slice %87 {offsets = [0, 128], sizes = [16, 128], strides = [1, 1]} : vector<16x384xbf16> to vector<16x128xbf16>
      %104 = vector.extract_strided_slice %93 {offsets = [0, 128], sizes = [16, 128], strides = [1, 1]} : vector<16x384xf32> to vector<16x128xf32>
      %105 = arith.extf %103 : vector<16x128xbf16> to vector<16x128xf32>
      %106 = arith.addf %105, %104 : vector<16x128xf32>
      %107 = arith.negf %106 : vector<16x128xf32>
      %108 = math.exp %107 : vector<16x128xf32>
      %cst_63 = arith.constant 1.000000e+00 : f32
      %109 = vector.broadcast %cst_63 : f32 to vector<16x128xf32>
      %110 = arith.addf %109, %108 : vector<16x128xf32>
      %111 = arith.divf %109, %110 : vector<16x128xf32>
      %112 = vector.extract_strided_slice %87 {offsets = [0, 256], sizes = [16, 128], strides = [1, 1]} : vector<16x384xbf16> to vector<16x128xbf16>
      %113 = vector.extract_strided_slice %93 {offsets = [0, 256], sizes = [16, 128], strides = [1, 1]} : vector<16x384xf32> to vector<16x128xf32>
      %c0_64 = arith.constant 0 : index
      %c0_65 = arith.constant 0 : index
      %114 = vector.load %arg11[%c0_64, %c0_65] : memref<1x128xf32, #tpu.memory_space<vmem>>, vector<1x128xf32>
      %115 = vector.broadcast %114 : vector<1x128xf32> to vector<16x128xf32>
      %116 = arith.addf %113, %115 : vector<16x128xf32>
      %117 = arith.mulf %102, %116 : vector<16x128xf32>
      %118 = arith.extf %112 : vector<16x128xbf16> to vector<16x128xf32>
      %119 = arith.addf %118, %117 : vector<16x128xf32>
      %120 = math.tanh %119 : vector<16x128xf32>
      %cst_66 = arith.constant 1.000000e+00 : f32
      %121 = vector.broadcast %cst_66 : f32 to vector<16x128xf32>
      %122 = arith.subf %121, %111 : vector<16x128xf32>
      %123 = arith.mulf %122, %120 : vector<16x128xf32>
      %124 = arith.mulf %111, %88 : vector<16x128xf32>
      %125 = arith.addf %123, %124 : vector<16x128xf32>
      %126 = vector.shape_cast %90 : vector<16x1xi1> to vector<16x1xi1>
      %127 = vector.broadcast %126 : vector<16x1xi1> to vector<16x128xi1>
      %128 = arith.select %127, %125, %88 : vector<16x128xi1>, vector<16x128xf32>
      %c0_67 = arith.constant 0 : index
      %c0_68 = arith.constant 0 : index
      %129 = vector.load %arg19[%c0_67, %c0_68] : memref<16x128xf32, #tpu.memory_space<vmem>>, vector<16x128xf32>
      tpu.vector_store %arg19[%c0_67, %c0_68], %128 {strides = array<i32>} : memref<16x128xf32, #tpu.memory_space<vmem>>, vector<16x128xf32>,
    }
    %c0_26 = arith.constant 0 : index
    %c0_27 = arith.constant 0 : index
    %27 = vector.load %arg19[%c0_26, %c0_27] : memref<16x128xf32, #tpu.memory_space<vmem>>, vector<16x128xf32>
    %c0_28 = arith.constant 0 : index
    %c0_29 = arith.constant 0 : index
    %28 = vector.load %arg12[%c0_28, %c0_29] : memref<128x128xf32, #tpu.memory_space<vmem>>, vector<128x128xf32>
    %cst_30 = arith.constant dense<0.000000e+00> : vector<16x128xf32>
    %29 = tpu.matmul %27, %28, %cst_30 {dimension_numbers = #tpu.dot_dimension_numbers<[1], [0], [0], [1], [0, 0, 1, 1], [], []>} : vector<16x128xf32>, vector<128x128xf32>, vector<16x128xf32> -> vector<16x128xf32>
    %c0_31 = arith.constant 0 : index
    %c0_32 = arith.constant 0 : index
    %30 = vector.load %arg18[%c0_31, %c0_32] : memref<16x128xf32, #tpu.memory_space<vmem>>, vector<16x128xf32>
    %c0_33 = arith.constant 0 : index
    %c0_34 = arith.constant 0 : index
    %31 = vector.load %arg13[%c0_33, %c0_34] : memref<128x128xf32, #tpu.memory_space<vmem>>, vector<128x128xf32>
    %cst_35 = arith.constant dense<0.000000e+00> : vector<16x128xf32>
    %32 = tpu.matmul %30, %31, %cst_35 {dimension_numbers = #tpu.dot_dimension_numbers<[1], [0], [0], [1], [0, 0, 1, 1], [], []>} : vector<16x128xf32>, vector<128x128xf32>, vector<16x128xf32> -> vector<16x128xf32>
    %33 = arith.addf %29, %32 : vector<16x128xf32>
    %c0_36 = arith.constant 0 : index
    %c0_37 = arith.constant 0 : index
    %34 = vector.load %arg14[%c0_36, %c0_37] : memref<1x128xf32, #tpu.memory_space<vmem>>, vector<1x128xf32>
    %35 = vector.broadcast %34 : vector<1x128xf32> to vector<16x128xf32>
    %36 = arith.addf %33, %35 : vector<16x128xf32>
    %c0_38 = arith.constant 0 : index
    %c0_39 = arith.constant 0 : index
    %37 = vector.load %arg15[%c0_38, %c0_39] : memref<16x128xf32, #tpu.memory_space<vmem>>, vector<16x128xf32>
    tpu.vector_store %arg15[%c0_38, %c0_39], %36 {strides = array<i32>} : memref<16x128xf32, #tpu.memory_space<vmem>>, vector<16x128xf32>,
    return
  }
  func.func @transform_0(%arg0: i32, %arg1: memref<1xi32, #tpu.memory_space<smem>>) -> (i32, i32, i32) {
    %c0_i32 = arith.constant 0 : i32
    %c0_i32_0 = arith.constant 0 : i32
    %c0_i32_1 = arith.constant 0 : i32
    return %c0_i32, %arg0, %c0_i32_0 : i32, i32, i32
  }
  func.func @transform_1(%arg0: i32, %arg1: memref<1xi32, #tpu.memory_space<smem>>) -> (i32, i32) {
    %c0_i32 = arith.constant 0 : i32
    %c0_i32_0 = arith.constant 0 : i32
    return %arg0, %c0_i32 : i32, i32
  }
  func.func @transform_2(%arg0: i32, %arg1: memref<1xi32, #tpu.memory_space<smem>>) -> (i32, i32) {
    %c0_i32 = arith.constant 0 : i32
    %c0_i32_0 = arith.constant 0 : i32
    %c0_i32_1 = arith.constant 0 : i32
    return %c0_i32, %c0_i32_0 : i32, i32
  }
  func.func @transform_3(%arg0: i32, %arg1: memref<1xi32, #tpu.memory_space<smem>>) -> (i32, i32) {
    %c0_i32 = arith.constant 0 : i32
    %c0_i32_0 = arith.constant 0 : i32
    %c0_i32_1 = arith.constant 0 : i32
    return %c0_i32, %c0_i32_0 : i32, i32
  }
  func.func @transform_4(%arg0: i32, %arg1: memref<1xi32, #tpu.memory_space<smem>>) -> (i32, i32) {
    %c0_i32 = arith.constant 0 : i32
    %c0_i32_0 = arith.constant 0 : i32
    %c0_i32_1 = arith.constant 0 : i32
    return %c0_i32, %c0_i32_0 : i32, i32
  }
  func.func @transform_5(%arg0: i32, %arg1: memref<1xi32, #tpu.memory_space<smem>>) -> (i32, i32) {
    %c0_i32 = arith.constant 0 : i32
    %c0_i32_0 = arith.constant 0 : i32
    %c0_i32_1 = arith.constant 0 : i32
    return %c0_i32, %c0_i32_0 : i32, i32
  }
  func.func @transform_6(%arg0: i32, %arg1: memref<1xi32, #tpu.memory_space<smem>>) -> (i32, i32) {
    %c0_i32 = arith.constant 0 : i32
    %c0_i32_0 = arith.constant 0 : i32
    %c0_i32_1 = arith.constant 0 : i32
    return %c0_i32, %c0_i32_0 : i32, i32
  }
  func.func @transform_7(%arg0: i32, %arg1: memref<1xi32, #tpu.memory_space<smem>>) -> (i32, i32) {
    %c0_i32 = arith.constant 0 : i32
    %c0_i32_0 = arith.constant 0 : i32
    %c0_i32_1 = arith.constant 0 : i32
    return %c0_i32, %c0_i32_0 : i32, i32
  }
  func.func @transform_8(%arg0: i32, %arg1: memref<1xi32, #tpu.memory_space<smem>>) -> (i32, i32) {
    %c0_i32 = arith.constant 0 : i32
    %c0_i32_0 = arith.constant 0 : i32
    %c0_i32_1 = arith.constant 0 : i32
    return %c0_i32, %c0_i32_0 : i32, i32
  }
  func.func @transform_9(%arg0: i32, %arg1: memref<1xi32, #tpu.memory_space<smem>>) -> (i32, i32) {
    %c0_i32 = arith.constant 0 : i32
    %c0_i32_0 = arith.constant 0 : i32
    %c0_i32_1 = arith.constant 0 : i32
    return %c0_i32, %c0_i32_0 : i32, i32
  }
  func.func @transform_10(%arg0: i32, %arg1: memref<1xi32, #tpu.memory_space<smem>>) -> (i32, i32) {
    %c0_i32 = arith.constant 0 : i32
    %c0_i32_0 = arith.constant 0 : i32
    %c0_i32_1 = arith.constant 0 : i32
    return %c0_i32, %c0_i32_0 : i32, i32
  }
  func.func @transform_11(%arg0: i32, %arg1: memref<1xi32, #tpu.memory_space<smem>>) -> (i32, i32) {
    %c0_i32 = arith.constant 0 : i32
    %c0_i32_0 = arith.constant 0 : i32
    %c0_i32_1 = arith.constant 0 : i32
    return %c0_i32, %c0_i32_0 : i32, i32
  }
  func.func @transform_12(%arg0: i32, %arg1: memref<1xi32, #tpu.memory_space<smem>>) -> (i32, i32) {
    %c0_i32 = arith.constant 0 : i32
    %c0_i32_0 = arith.constant 0 : i32
    %c0_i32_1 = arith.constant 0 : i32
    return %c0_i32, %c0_i32_0 : i32, i32
  }
  func.func @transform_13(%arg0: i32, %arg1: memref<1xi32, #tpu.memory_space<smem>>) -> (i32, i32) {
    %c0_i32 = arith.constant 0 : i32
    %c0_i32_0 = arith.constant 0 : i32
    return %arg0, %c0_i32 : i32, i32
  }
}

</mosaic_0001>

<llo_original>
// kernel: tpu_custom_call.1
$region0: #{tpu_custom_call.1}
  #allocation0 [shape = 'u32[]', space=smem, size = 0x4, offset = 0x4, fixed_abs, tag = 'smem constant byte address 0x4 - core index']
  #allocation1 [shape = 'u32[72,128]{1,0:T(1,128)}', space=vmem, size = 0x9000, scoped, tag = 'internal scratch']
  #allocation2 [shape = 'bf16[8,16,384]{2,1,0:T(8,128)(2,1)}', space=vmem, size = 0x18000, scoped, tag = 'scratch operand']
  #allocation3 [shape = 'bf16[8,16,384]{2,1,0:T(8,128)(2,1)}', space=vmem, size = 0x18000, scoped, tag = 'scratch operand']
  #allocation4 [shape = 'f32[16,128]{1,0:T(8,128)}', space=vmem, size = 0x2000, scoped, tag = 'scratch operand']
  #allocation5 [shape = 'f32[16,128]{1,0:T(8,128)}', space=vmem, size = 0x2000, scoped, tag = 'scratch operand']
  #allocation6 [shape = 's32[1]{0}', space=sflag, size = 0x4, scoped, tag = 'scoped memory for tpu_custom_call.1']
  #allocation7 [shape = 's32[1]{0:T(128)S(6)}', space=smem, size = 0x200, scoped, tag = 'prefetched SMEM operand 0']
  %s0 = inlined_call_operand.<no memory space> [shape: s32[1], index: 0, kind: input, shape index: {}]
  %s1 = inlined_call_operand.hbm [shape: bf16[8,16,128], index: 1, kind: input, shape index: {}]
  %s2 = inlined_call_operand.vmem [shape: s32[16,1], index: 2, kind: input, shape index: {}]
  %s3 = inlined_call_operand.hbm [shape: bf16[128,384], index: 3, kind: input, shape index: {}]
  %s4 = inlined_call_operand.hbm [shape: bf16[128,384], index: 4, kind: input, shape index: {}]
  %s5 = inlined_call_operand.vmem [shape: f32[1,384], index: 5, kind: input, shape index: {}]
  %s6 = inlined_call_operand.vmem [shape: f32[1,128], index: 6, kind: input, shape index: {}]
  %s7 = inlined_call_operand.hbm [shape: bf16[128,384], index: 7, kind: input, shape index: {}]
  %s8 = inlined_call_operand.hbm [shape: bf16[128,384], index: 8, kind: input, shape index: {}]
  %s9 = inlined_call_operand.vmem [shape: f32[1,384], index: 9, kind: input, shape index: {}]
  %s10 = inlined_call_operand.vmem [shape: f32[1,128], index: 10, kind: input, shape index: {}]
  %s11 = inlined_call_operand.hbm [shape: f32[128,128], index: 11, kind: input, shape index: {}]
  %s12 = inlined_call_operand.hbm [shape: f32[128,128], index: 12, kind: input, shape index: {}]
  %s13 = inlined_call_operand.vmem [shape: f32[1,128], index: 13, kind: input, shape index: {}]
  %s14 = inlined_call_operand.hbm [shape: f32[16,128], index: 14, kind: output, shape index: {}]
  %s15 = sld [smem:[#allocation0]]
  $region97: #{tpu_custom_call.1} parent=0
    _
  %s17 = ssub.s32 1, %s15
  %s18 = scalar_select 0, %s17, %s15
  %19 = sst [smem:[#allocation7]] %s0
  $region1: #{tpu_custom_call.1} parent=0
    #allocation8 [shape = 'u8[32768]{0}', space=vmem, size = 0x8000, scoped, tag = 'input window, operand 1, single buffered']
    #allocation9 [shape = 's32[1]{0}', space=sflag, size = 0x4, scoped, tag = 'scoped memory for tpu_custom_call.1']
    #allocation10 [shape = 's32[1]{0}', space=sflag, size = 0x4, scoped, tag = 'scoped memory for tpu_custom_call.1']
    #allocation11 [shape = 'u8[98304]{0}', space=vmem, size = 0x18000, scoped, tag = 'input window, operand 3, single buffered']
    #allocation12 [shape = 's32[1]{0}', space=sflag, size = 0x4, scoped, tag = 'scoped memory for tpu_custom_call.1']
    #allocation13 [shape = 'u8[98304]{0}', space=vmem, size = 0x18000, scoped, tag = 'input window, operand 4, single buffered']
    #allocation14 [shape = 'u8[98304]{0}', space=vmem, size = 0x18000, scoped, tag = 'input window, operand 7, single buffered']
    #allocation15 [shape = 's32[1]{0}', space=sflag, size = 0x4, scoped, tag = 'scoped memory for tpu_custom_call.1']
    #allocation16 [shape = 'u8[98304]{0}', space=vmem, size = 0x18000, scoped, tag = 'input window, operand 8, single buffered']
    #allocation17 [shape = 'u8[65536]{0}', space=vmem, size = 0x10000, scoped, tag = 'input window, operand 11, single buffered']
    #allocation18 [shape = 's32[1]{0}', space=sflag, size = 0x4, scoped, tag = 'scoped memory for tpu_custom_call.1']
    #allocation19 [shape = 'u8[65536]{0}', space=vmem, size = 0x10000, scoped, tag = 'input window, operand 12, single buffered']
    #allocation20 [shape = 'u8[8192]{0}', space=vmem, size = 0x2000, scoped, tag = 'output window, operand 0, single buffered']
    %20 = vsyncpa [#allocation9], 0
    %21 = vsyncpa [#allocation12], 0
    %22 = vsyncpa [#allocation15], 0
    %23 = vsyncpa [#allocation18], 0
    %24 = vsyncpa [#allocation10], 0
    // Predicated region
    $region2: #{tpu_custom_call.1} parent=1 // pred_check
      _
    $region3: #{tpu_custom_call.1} parent=1 // pred_check_branch
      %26 = sbr.rel (0) target = $region5
    $region4: #{tpu_custom_call.1} parent=1 // pred_region
      %28 = vsyncadd [#allocation9], 0
      %s29 = sshll.u32 %s1, 4
      %s30 = int_to_ptr.hbm [resolvable:$true] %s29
      %s31 = sshll.u32 [#allocation8], 4
      %s32 = int_to_ptr.vmem [resolvable:$true] %s31
      %37 = dma.hbm_to_vmem [thread:$0]  %s30, 1024, %s32, [#allocation9], 64, 64, 4
    $region5: #{tpu_custom_call.1} parent=1 // pred_fallthru
      _
    // Predicated region
    $region6: #{tpu_custom_call.1} parent=1 // pred_check
      _
    $region7: #{tpu_custom_call.1} parent=1 // pred_check_branch
      %39 = sbr.rel (0) target = $region9
    $region8: #{tpu_custom_call.1} parent=1 // pred_region
      _
    $region9: #{tpu_custom_call.1} parent=1 // pred_fallthru
      _
    // Predicated region
    $region10: #{tpu_custom_call.1} parent=1 // pred_check
      _
    $region11: #{tpu_custom_call.1} parent=1 // pred_check_branch
      %41 = sbr.rel (0) target = $region13
    $region12: #{tpu_custom_call.1} parent=1 // pred_region
      %43 = vsyncadd [#allocation12], 0
      %s44 = sshll.u32 %s3, 4
      %s45 = int_to_ptr.hbm [resolvable:$true] %s44
      %s46 = sshll.u32 [#allocation11], 4
      %s47 = int_to_ptr.vmem [resolvable:$true] %s46
      %52 = dma.hbm_to_vmem [thread:$0]  %s45, 3072, %s47, [#allocation12], 192, 192, 12
    $region13: #{tpu_custom_call.1} parent=1 // pred_fallthru
      _
    // Predicated region
    $region14: #{tpu_custom_call.1} parent=1 // pred_check
      _
    $region15: #{tpu_custom_call.1} parent=1 // pred_check_branch
      %54 = sbr.rel (0) target = $region17
    $region16: #{tpu_custom_call.1} parent=1 // pred_region
      %56 = vsyncadd [#allocation12], 0
      %s57 = sshll.u32 %s4, 4
      %s58 = int_to_ptr.hbm [resolvable:$true] %s57
      %s59 = sshll.u32 [#allocation13], 4
      %s60 = int_to_ptr.vmem [resolvable:$true] %s59
      %65 = dma.hbm_to_vmem [thread:$0]  %s58, 3072, %s60, [#allocation12], 192, 192, 12
    $region17: #{tpu_custom_call.1} parent=1 // pred_fallthru
      _
    // Predicated region
    $region18: #{tpu_custom_call.1} parent=1 // pred_check
      _
    $region19: #{tpu_custom_call.1} parent=1 // pred_check_branch
      %67 = sbr.rel (0) target = $region21
    $region20: #{tpu_custom_call.1} parent=1 // pred_region
      _
    $region21: #{tpu_custom_call.1} parent=1 // pred_fallthru
      _
    // Predicated region
    $region22: #{tpu_custom_call.1} parent=1 // pred_check
      _
    $region23: #{tpu_custom_call.1} parent=1 // pred_check_branch
      %69 = sbr.rel (0) target = $region25
    $region24: #{tpu_custom_call.1} parent=1 // pred_region
      _
    $region25: #{tpu_custom_call.1} parent=1 // pred_fallthru
      _
    // Predicated region
    $region26: #{tpu_custom_call.1} parent=1 // pred_check
      _
    $region27: #{tpu_custom_call.1} parent=1 // pred_check_branch
      %71 = sbr.rel (0) target = $region29
    $region28: #{tpu_custom_call.1} parent=1 // pred_region
      %73 = vsyncadd [#allocation15], 0
      %s74 = sshll.u32 %s7, 4
      %s75 = int_to_ptr.hbm [resolvable:$true] %s74
      %s76 = sshll.u32 [#allocation14], 4
      %s77 = int_to_ptr.vmem [resolvable:$true] %s76
      %82 = dma.hbm_to_vmem [thread:$0]  %s75, 3072, %s77, [#allocation15], 192, 192, 12
    $region29: #{tpu_custom_call.1} parent=1 // pred_fallthru
      _
    // Predicated region
    $region30: #{tpu_custom_call.1} parent=1 // pred_check
      _
    $region31: #{tpu_custom_call.1} parent=1 // pred_check_branch
      %84 = sbr.rel (0) target = $region33
    $region32: #{tpu_custom_call.1} parent=1 // pred_region
      %86 = vsyncadd [#allocation15], 0
      %s87 = sshll.u32 %s8, 4
      %s88 = int_to_ptr.hbm [resolvable:$true] %s87
      %s89 = sshll.u32 [#allocation16], 4
      %s90 = int_to_ptr.vmem [resolvable:$true] %s89
      %95 = dma.hbm_to_vmem [thread:$0]  %s88, 3072, %s90, [#allocation15], 192, 192, 12
    $region33: #{tpu_custom_call.1} parent=1 // pred_fallthru
      _
    // Predicated region
    $region34: #{tpu_custom_call.1} parent=1 // pred_check
      _
    $region35: #{tpu_custom_call.1} parent=1 // pred_check_branch
      %97 = sbr.rel (0) target = $region37
    $region36: #{tpu_custom_call.1} parent=1 // pred_region
      _
    $region37: #{tpu_custom_call.1} parent=1 // pred_fallthru
      _
    // Predicated region
    $region38: #{tpu_custom_call.1} parent=1 // pred_check
      _
    $region39: #{tpu_custom_call.1} parent=1 // pred_check_branch
      %99 = sbr.rel (0) target = $region41
    $region40: #{tpu_custom_call.1} parent=1 // pred_region
      _
    $region41: #{tpu_custom_call.1} parent=1 // pred_fallthru
      _
    // Predicated region
    $region42: #{tpu_custom_call.1} parent=1 // pred_check
      _
    $region43: #{tpu_custom_call.1} parent=1 // pred_check_branch
      %101 = sbr.rel (0) target = $region45
    $region44: #{tpu_custom_call.1} parent=1 // pred_region
      %103 = vsyncadd [#allocation18], 0
      %s104 = sshll.u32 %s11, 4
      %s105 = int_to_ptr.hbm [resolvable:$true] %s104
      %s106 = sshll.u32 [#allocation17], 4
      %s107 = int_to_ptr.vmem [resolvable:$true] %s106
      %112 = dma.hbm_to_vmem [thread:$0]  %s105, 2048, %s107, [#allocation18], 128, 128, 8
    $region45: #{tpu_custom_call.1} parent=1 // pred_fallthru
      _
    // Predicated region
    $region46: #{tpu_custom_call.1} parent=1 // pred_check
      _
    $region47: #{tpu_custom_call.1} parent=1 // pred_check_branch
      %114 = sbr.rel (0) target = $region49
    $region48: #{tpu_custom_call.1} parent=1 // pred_region
      %116 = vsyncadd [#allocation18], 0
      %s117 = sshll.u32 %s12, 4
      %s118 = int_to_ptr.hbm [resolvable:$true] %s117
      %s119 = sshll.u32 [#allocation19], 4
      %s120 = int_to_ptr.vmem [resolvable:$true] %s119
      %125 = dma.hbm_to_vmem [thread:$0]  %s118, 2048, %s120, [#allocation18], 128, 128, 8
    $region49: #{tpu_custom_call.1} parent=1 // pred_fallthru
      _
    // Predicated region
    $region50: #{tpu_custom_call.1} parent=1 // pred_check
      _
    $region51: #{tpu_custom_call.1} parent=1 // pred_check_branch
      %127 = sbr.rel (0) target = $region53
    $region52: #{tpu_custom_call.1} parent=1 // pred_region
      _
    $region53: #{tpu_custom_call.1} parent=1 // pred_fallthru
      _
    // Predicated region
    $region54: #{tpu_custom_call.1} parent=1 // pred_check
      _
    $region55: #{tpu_custom_call.1} parent=1 // pred_check_branch
      %129 = sbr.rel (0) target = $region57
    $region56: #{tpu_custom_call.1} parent=1 // pred_region
      %131 = dma.done [#allocation9], 1024
    $region57: #{tpu_custom_call.1} parent=1 // pred_fallthru
      _
    // Predicated region
    $region58: #{tpu_custom_call.1} parent=1 // pred_check
      _
    $region59: #{tpu_custom_call.1} parent=1 // pred_check_branch
      %133 = sbr.rel (0) target = $region61
    $region60: #{tpu_custom_call.1} parent=1 // pred_region
      %135 = dma.done [#allocation12], 3072
    $region61: #{tpu_custom_call.1} parent=1 // pred_fallthru
      _
    // Predicated region
    $region62: #{tpu_custom_call.1} parent=1 // pred_check
      _
    $region63: #{tpu_custom_call.1} parent=1 // pred_check_branch
      %137 = sbr.rel (0) target = $region65
    $region64: #{tpu_custom_call.1} parent=1 // pred_region
      %139 = dma.done [#allocation12], 3072
    $region65: #{tpu_custom_call.1} parent=1 // pred_fallthru
      _
    // Predicated region
    $region66: #{tpu_custom_call.1} parent=1 // pred_check
      _
    $region67: #{tpu_custom_call.1} parent=1 // pred_check_branch
      %141 = sbr.rel (0) target = $region69
    $region68: #{tpu_custom_call.1} parent=1 // pred_region
      %143 = dma.done [#allocation15], 3072
    $region69: #{tpu_custom_call.1} parent=1 // pred_fallthru
      _
    // Predicated region
    $region70: #{tpu_custom_call.1} parent=1 // pred_check
      _
    $region71: #{tpu_custom_call.1} parent=1 // pred_check_branch
      %145 = sbr.rel (0) target = $region73
    $region72: #{tpu_custom_call.1} parent=1 // pred_region
      %147 = dma.done [#allocation15], 3072
    $region73: #{tpu_custom_call.1} parent=1 // pred_fallthru
      _
    // Predicated region
    $region74: #{tpu_custom_call.1} parent=1 // pred_check
      _
    $region75: #{tpu_custom_call.1} parent=1 // pred_check_branch
      %149 = sbr.rel (0) target = $region77
    $region76: #{tpu_custom_call.1} parent=1 // pred_region
      %151 = dma.done [#allocation18], 2048
    $region77: #{tpu_custom_call.1} parent=1 // pred_fallthru
      _
    // Predicated region
    $region78: #{tpu_custom_call.1} parent=1 // pred_check
      _
    $region79: #{tpu_custom_call.1} parent=1 // pred_check_branch
      %153 = sbr.rel (0) target = $region81
    $region80: #{tpu_custom_call.1} parent=1 // pred_region
      %155 = dma.done [#allocation18], 2048
    $region81: #{tpu_custom_call.1} parent=1 // pred_fallthru
      _
    %v156 = vld [vmem:[#allocation8] sm:$0xf]
    %v157 = vld [vmem:[#allocation8 + $0x4] sm:$0xf]
    %v158 = vld [vmem:[#allocation8 + $0x8] sm:$0xf]
    %v159 = vld [vmem:[#allocation8 + $0xc] sm:$0xf]
    %v160 = vld [vmem:[#allocation8 + $0x10] sm:$0xf]
    %v161 = vld [vmem:[#allocation8 + $0x14] sm:$0xf]
    %v162 = vld [vmem:[#allocation8 + $0x18] sm:$0xf]
    %v163 = vld [vmem:[#allocation8 + $0x1c] sm:$0xf]
    %v164 = vld [vmem:[#allocation8 + $0x20] sm:$0xf]
    %v165 = vld [vmem:[#allocation8 + $0x24] sm:$0xf]
    %v166 = vld [vmem:[#allocation8 + $0x28] sm:$0xf]
    %v167 = vld [vmem:[#allocation8 + $0x2c] sm:$0xf]
    %v168 = vld [vmem:[#allocation8 + $0x30] sm:$0xf]
    %v169 = vld [vmem:[#allocation8 + $0x34] sm:$0xf]
    %v170 = vld [vmem:[#allocation8 + $0x38] sm:$0xf]
    %v171 = vld [vmem:[#allocation8 + $0x3c] sm:$0xf]
    %v172 = vld [vmem:[#allocation11] sm:$0xff]
    %v173 = vld [vmem:[#allocation11 + $0x8] sm:$0xf]
    %v174 = vld [vmem:[#allocation11 + $0xc] sm:$0xff]
    %v175 = vld [vmem:[#allocation11 + $0x14] sm:$0xf]
    %v176 = vld [vmem:[#allocation11 + $0x18] sm:$0xff]
    %v177 = vld [vmem:[#allocation11 + $0x20] sm:$0xf]
    %v178 = vld [vmem:[#allocation11 + $0x24] sm:$0xff]
    %v179 = vld [vmem:[#allocation11 + $0x2c] sm:$0xf]
    %v180 = vld [vmem:[#allocation11 + $0x30] sm:$0xff]
    %v181 = vld [vmem:[#allocation11 + $0x38] sm:$0xf]
    %v182 = vld [vmem:[#allocation11 + $0x3c] sm:$0xff]
    %v183 = vld [vmem:[#allocation11 + $0x44] sm:$0xf]
    %v184 = vld [vmem:[#allocation11 + $0x48] sm:$0xff]
    %v185 = vld [vmem:[#allocation11 + $0x50] sm:$0xf]
    %v186 = vld [vmem:[#allocation11 + $0x54] sm:$0xff]
    %v187 = vld [vmem:[#allocation11 + $0x5c] sm:$0xf]
    %v188 = vld [vmem:[#allocation11 + $0x60] sm:$0xff]
    %v189 = vld [vmem:[#allocation11 + $0x68] sm:$0xf]
    %v190 = vld [vmem:[#allocation11 + $0x6c] sm:$0xff]
    %v191 = vld [vmem:[#allocation11 + $0x74] sm:$0xf]
    %v192 = vld [vmem:[#allocation11 + $0x78] sm:$0xff]
    %v193 = vld [vmem:[#allocation11 + $0x80] sm:$0xf]
    %v194 = vld [vmem:[#allocation11 + $0x84] sm:$0xff]
    %v195 = vld [vmem:[#allocation11 + $0x8c] sm:$0xf]
    %v196 = vld [vmem:[#allocation11 + $0x90] sm:$0xff]
    %v197 = vld [vmem:[#allocation11 + $0x98] sm:$0xf]
    %v198 = vld [vmem:[#allocation11 + $0x9c] sm:$0xff]
    %v199 = vld [vmem:[#allocation11 + $0xa4] sm:$0xf]
    %v200 = vld [vmem:[#allocation11 + $0xa8] sm:$0xff]
    %v201 = vld [vmem:[#allocation11 + $0xb0] sm:$0xf]
    %v202 = vld [vmem:[#allocation11 + $0xb4] sm:$0xff]
    %v203 = vld [vmem:[#allocation11 + $0xbc] sm:$0xf]
    %v204 = vld [vmem:[%s5] sm:$0x7]
    %v206 = vperm.slane %v204, 0
    %v207 = vperm.slane %v204, 1
    %v208 = vperm.slane %v204, 2
    %v228 = vunpack.c.l.b16 %v156
    %v229 = vunpack.c.l.b16 %v157
    %v230 = vunpack.c.l.b16 %v158
    %v231 = vunpack.c.l.b16 %v159
    %v232 = vunpack.c.l.b16 %v160
    %v233 = vunpack.c.l.b16 %v161
    %v234 = vunpack.c.l.b16 %v162
    %v235 = vunpack.c.l.b16 %v163
    %v236 = vunpack.c.l.b16 %v164
    %v237 = vunpack.c.l.b16 %v165
    %v238 = vunpack.c.l.b16 %v166
    %v239 = vunpack.c.l.b16 %v167
    %v240 = vunpack.c.l.b16 %v168
    %v241 = vunpack.c.l.b16 %v169
    %v242 = vunpack.c.l.b16 %v170
    %v243 = vunpack.c.l.b16 %v171
    %v244 = vpack.c.b16 %v229, %v228
    %v245 = vpack.c.b16 %v231, %v230
    %v246 = vpack.c.b16 %v233, %v232
    %v247 = vpack.c.b16 %v235, %v234
    %v248 = vpack.c.b16 %v237, %v236
    %v249 = vpack.c.b16 %v239, %v238
    %v250 = vpack.c.b16 %v241, %v240
    %v251 = vpack.c.b16 %v243, %v242
    %v292 = vunpack.c.l.b16 %v172
    %v293 = vunpack.c.h.b16 %v172
    %v294 = vunpack.c.l.b16 %v173
    %v295 = vunpack.c.l.b16 %v174
    %v296 = vunpack.c.h.b16 %v174
    %v297 = vunpack.c.l.b16 %v175
    %v298 = vunpack.c.l.b16 %v176
    %v299 = vunpack.c.h.b16 %v176
    %v300 = vunpack.c.l.b16 %v177
    %v301 = vunpack.c.l.b16 %v178
    %v302 = vunpack.c.h.b16 %v178
    %v303 = vunpack.c.l.b16 %v179
    %v304 = vunpack.c.l.b16 %v180
    %v305 = vunpack.c.h.b16 %v180
    %v306 = vunpack.c.l.b16 %v181
    %v307 = vunpack.c.l.b16 %v182
    %v308 = vunpack.c.h.b16 %v182
    %v309 = vunpack.c.l.b16 %v183
    %v310 = vunpack.c.l.b16 %v184
    %v311 = vunpack.c.h.b16 %v184
    %v312 = vunpack.c.l.b16 %v185
    %v313 = vunpack.c.l.b16 %v186
    %v314 = vunpack.c.h.b16 %v186
    %v315 = vunpack.c.l.b16 %v187
    %v316 = vunpack.c.l.b16 %v188
    %v317 = vunpack.c.h.b16 %v188
    %v318 = vunpack.c.l.b16 %v189
    %v319 = vunpack.c.l.b16 %v190
    %v320 = vunpack.c.h.b16 %v190
    %v321 = vunpack.c.l.b16 %v191
    %v322 = vunpack.c.l.b16 %v192
    %v323 = vunpack.c.h.b16 %v192
    %v324 = vunpack.c.l.b16 %v193
    %v325 = vunpack.c.l.b16 %v194
    %v326 = vunpack.c.h.b16 %v194
    %v327 = vunpack.c.l.b16 %v195
    %v328 = vunpack.c.l.b16 %v196
    %v329 = vunpack.c.h.b16 %v196
    %v330 = vunpack.c.l.b16 %v197
    %v331 = vunpack.c.l.b16 %v198
    %v332 = vunpack.c.h.b16 %v198
    %v333 = vunpack.c.l.b16 %v199
    %v334 = vunpack.c.l.b16 %v200
    %v335 = vunpack.c.h.b16 %v200
    %v336 = vunpack.c.l.b16 %v201
    %v337 = vunpack.c.l.b16 %v202
    %v338 = vunpack.c.h.b16 %v202
    %v339 = vunpack.c.l.b16 %v203
    %v340 = vpack.c.b16 %v295, %v292
    %v341 = vpack.c.b16 %v296, %v293
    %v342 = vpack.c.b16 %v297, %v294
    %v343 = vpack.c.b16 %v301, %v298
    %v344 = vpack.c.b16 %v302, %v299
    %v345 = vpack.c.b16 %v303, %v300
    %v346 = vpack.c.b16 %v307, %v304
    %v347 = vpack.c.b16 %v308, %v305
    %v348 = vpack.c.b16 %v309, %v306
    %v349 = vpack.c.b16 %v313, %v310
    %v350 = vpack.c.b16 %v314, %v311
    %v351 = vpack.c.b16 %v315, %v312
    %v352 = vpack.c.b16 %v319, %v316
    %v353 = vpack.c.b16 %v320, %v317
    %v354 = vpack.c.b16 %v321, %v318
    %v355 = vpack.c.b16 %v325, %v322
    %v356 = vpack.c.b16 %v326, %v323
    %v357 = vpack.c.b16 %v327, %v324
    %v358 = vpack.c.b16 %v331, %v328
    %v359 = vpack.c.b16 %v332, %v329
    %v360 = vpack.c.b16 %v333, %v330
    %v361 = vpack.c.b16 %v337, %v334
    %v362 = vpack.c.b16 %v338, %v335
    %v363 = vpack.c.b16 %v339, %v336
    %388 = vmatpush.bf16.msra.mxu0 %v361
    %389 = vmatpush.bf16.msra.mxu0 %v358
    %390 = vmatpush.bf16.msra.mxu0 %v355
    %391 = vmatpush.bf16.msra.mxu0 %v352
    %392 = vmatpush.bf16.msra.mxu0 %v349
    %393 = vmatpush.bf16.msra.mxu0 %v346
    %394 = vmatpush.bf16.msra.mxu0 %v343
    %395 = vmatpush.bf16.msra.mxu0 %v340
    %396 = vmatmul.bf16.gmra.mxu0 %v244
    %v397 = vpop.f32.mrf.mxu0
    %v398 = vadd.f32 %v206, %v397
    %v399 = vpop.f32.mrf.mxu0
    %v400 = vadd.f32 %v206, %v399
    %401 = vmatmul.bf16.gmra.mxu0 %v245
    %v402 = vpop.f32.mrf.mxu0
    %v403 = vadd.f32 %v206, %v402
    %v404 = vpop.f32.mrf.mxu0
    %v405 = vadd.f32 %v206, %v404
    %406 = vmatmul.bf16.gmra.mxu0 %v246
    %v407 = vpop.f32.mrf.mxu0
    %v408 = vadd.f32 %v206, %v407
    %v409 = vpop.f32.mrf.mxu0
    %v410 = vadd.f32 %v206, %v409
    %411 = vmatmul.bf16.gmra.mxu0 %v247
    %v412 = vpop.f32.mrf.mxu0
    %v413 = vadd.f32 %v206, %v412
    %v414 = vpop.f32.mrf.mxu0
    %v415 = vadd.f32 %v206, %v414
    %416 = vmatmul.bf16.gmra.mxu0 %v248
    %v417 = vpop.f32.mrf.mxu0
    %v418 = vadd.f32 %v206, %v417
    %v419 = vpop.f32.mrf.mxu0
    %v420 = vadd.f32 %v206, %v419
    %421 = vmatmul.bf16.gmra.mxu0 %v249
    %v422 = vpop.f32.mrf.mxu0
    %v423 = vadd.f32 %v206, %v422
    %v424 = vpop.f32.mrf.mxu0
    %v425 = vadd.f32 %v206, %v424
    %426 = vmatmul.bf16.gmra.mxu0 %v250
    %v427 = vpop.f32.mrf.mxu0
    %v428 = vadd.f32 %v206, %v427
    %v429 = vpop.f32.mrf.mxu0
    %v430 = vadd.f32 %v206, %v429
    %431 = vmatmul.bf16.gmra.mxu0 %v251
    %v432 = vpop.f32.mrf.mxu0
    %v433 = vadd.f32 %v206, %v432
    %v434 = vpop.f32.mrf.mxu0
    %v435 = vadd.f32 %v206, %v434
    %436 = vdwg.mxu0
    %437 = vmatpush.bf16.msra.mxu0 %v362
    %438 = vmatpush.bf16.msra.mxu0 %v359
    %439 = vmatpush.bf16.msra.mxu0 %v356
    %440 = vmatpush.bf16.msra.mxu0 %v353
    %441 = vmatpush.bf16.msra.mxu0 %v350
    %442 = vmatpush.bf16.msra.mxu0 %v347
    %443 = vmatpush.bf16.msra.mxu0 %v344
    %444 = vmatpush.bf16.msra.mxu0 %v341
    %445 = vmatmul.bf16.gmra.mxu0 %v244
    %v446 = vpop.f32.mrf.mxu0
    %v447 = vadd.f32 %v207, %v446
    %v448 = vpop.f32.mrf.mxu0
    %v449 = vadd.f32 %v207, %v448
    %450 = vmatmul.bf16.gmra.mxu0 %v245
    %v451 = vpop.f32.mrf.mxu0
    %v452 = vadd.f32 %v207, %v451
    %v453 = vpop.f32.mrf.mxu0
    %v454 = vadd.f32 %v207, %v453
    %455 = vmatmul.bf16.gmra.mxu0 %v246
    %v456 = vpop.f32.mrf.mxu0
    %v457 = vadd.f32 %v207, %v456
    %v458 = vpop.f32.mrf.mxu0
    %v459 = vadd.f32 %v207, %v458
    %460 = vmatmul.bf16.gmra.mxu0 %v247
    %v461 = vpop.f32.mrf.mxu0
    %v462 = vadd.f32 %v207, %v461
    %v463 = vpop.f32.mrf.mxu0
    %v464 = vadd.f32 %v207, %v463
    %465 = vmatmul.bf16.gmra.mxu0 %v248
    %v466 = vpop.f32.mrf.mxu0
    %v467 = vadd.f32 %v207, %v466
    %v468 = vpop.f32.mrf.mxu0
    %v469 = vadd.f32 %v207, %v468
    %470 = vmatmul.bf16.gmra.mxu0 %v249
    %v471 = vpop.f32.mrf.mxu0
    %v472 = vadd.f32 %v207, %v471
    %v473 = vpop.f32.mrf.mxu0
    %v474 = vadd.f32 %v207, %v473
    %475 = vmatmul.bf16.gmra.mxu0 %v250
    %v476 = vpop.f32.mrf.mxu0
    %v477 = vadd.f32 %v207, %v476
    %v478 = vpop.f32.mrf.mxu0
    %v479 = vadd.f32 %v207, %v478
    %480 = vmatmul.bf16.gmra.mxu0 %v251
    %v481 = vpop.f32.mrf.mxu0
    %v482 = vadd.f32 %v207, %v481
    %v483 = vpop.f32.mrf.mxu0
    %v484 = vadd.f32 %v207, %v483
    %485 = vdwg.mxu0
    %486 = vmatpush.bf16.msra.mxu0 %v363
    %487 = vmatpush.bf16.msra.mxu0 %v360
    %488 = vmatpush.bf16.msra.mxu0 %v357
    %489 = vmatpush.bf16.msra.mxu0 %v354
    %490 = vmatpush.bf16.msra.mxu0 %v351
    %491 = vmatpush.bf16.msra.mxu0 %v348
    %492 = vmatpush.bf16.msra.mxu0 %v345
    %493 = vmatpush.bf16.msra.mxu0 %v342
    %494 = vmatmul.bf16.gmra.mxu0 %v244
    %v495 = vpop.f32.mrf.mxu0
    %v496 = vadd.f32 %v208, %v495
    %v497 = vpop.f32.mrf.mxu0
    %v498 = vadd.f32 %v208, %v497
    %499 = vmatmul.bf16.gmra.mxu0 %v245
    %v500 = vpop.f32.mrf.mxu0
    %v501 = vadd.f32 %v208, %v500
    %v502 = vpop.f32.mrf.mxu0
    %v503 = vadd.f32 %v208, %v502
    %504 = vmatmul.bf16.gmra.mxu0 %v246
    %v505 = vpop.f32.mrf.mxu0
    %v506 = vadd.f32 %v208, %v505
    %v507 = vpop.f32.mrf.mxu0
    %v508 = vadd.f32 %v208, %v507
    %509 = vmatmul.bf16.gmra.mxu0 %v247
    %v510 = vpop.f32.mrf.mxu0
    %v511 = vadd.f32 %v208, %v510
    %v512 = vpop.f32.mrf.mxu0
    %v513 = vadd.f32 %v208, %v512
    %514 = vmatmul.bf16.gmra.mxu0 %v248
    %v515 = vpop.f32.mrf.mxu0
    %v516 = vadd.f32 %v208, %v515
    %v517 = vpop.f32.mrf.mxu0
    %v518 = vadd.f32 %v208, %v517
    %519 = vmatmul.bf16.gmra.mxu0 %v249
    %v520 = vpop.f32.mrf.mxu0
    %v521 = vadd.f32 %v208, %v520
    %v522 = vpop.f32.mrf.mxu0
    %v523 = vadd.f32 %v208, %v522
    %524 = vmatmul.bf16.gmra.mxu0 %v250
    %v525 = vpop.f32.mrf.mxu0
    %v526 = vadd.f32 %v208, %v525
    %v527 = vpop.f32.mrf.mxu0
    %v528 = vadd.f32 %v208, %v527
    %529 = vmatmul.bf16.gmra.mxu0 %v251
    %v530 = vpop.f32.mrf.mxu0
    %v531 = vadd.f32 %v208, %v530
    %v532 = vpop.f32.mrf.mxu0
    %v533 = vadd.f32 %v208, %v532
    %534 = vdwg.mxu0
    %v535 = vpack.c.bf16 %v447, %v398
    %v536 = vpack.c.bf16 %v496, %v496
    %v537 = vpack.c.bf16 %v449, %v400
    %v538 = vpack.c.bf16 %v498, %v498
    %v539 = vpack.c.bf16 %v452, %v403
    %v540 = vpack.c.bf16 %v501, %v501
    %v541 = vpack.c.bf16 %v454, %v405
    %v542 = vpack.c.bf16 %v503, %v503
    %v543 = vpack.c.bf16 %v457, %v408
    %v544 = vpack.c.bf16 %v506, %v506
    %v545 = vpack.c.bf16 %v459, %v410
    %v546 = vpack.c.bf16 %v508, %v508
    %v547 = vpack.c.bf16 %v462, %v413
    %v548 = vpack.c.bf16 %v511, %v511
    %v549 = vpack.c.bf16 %v464, %v415
    %v550 = vpack.c.bf16 %v513, %v513
    %v551 = vpack.c.bf16 %v467, %v418
    %v552 = vpack.c.bf16 %v516, %v516
    %v553 = vpack.c.bf16 %v469, %v420
    %v554 = vpack.c.bf16 %v518, %v518
    %v555 = vpack.c.bf16 %v472, %v423
    %v556 = vpack.c.bf16 %v521, %v521
    %v557 = vpack.c.bf16 %v474, %v425
    %v558 = vpack.c.bf16 %v523, %v523
    %v559 = vpack.c.bf16 %v477, %v428
    %v560 = vpack.c.bf16 %v526, %v526
    %v561 = vpack.c.bf16 %v479, %v430
    %v562 = vpack.c.bf16 %v528, %v528
    %v563 = vpack.c.bf16 %v482, %v433
    %v564 = vpack.c.bf16 %v531, %v531
    %v565 = vpack.c.bf16 %v484, %v435
    %v566 = vpack.c.bf16 %v533, %v533
    %567 = vst [vmem:[#allocation2] sm:$0xff] %v535
    %568 = vst [vmem:[#allocation2 + $0x8] sm:$0xf] %v536
    %569 = vst [vmem:[#allocation2 + $0xc] sm:$0xff] %v537
    %570 = vst [vmem:[#allocation2 + $0x14] sm:$0xf] %v538
    %571 = vst [vmem:[#allocation2 + $0x18] sm:$0xff] %v539
    %572 = vst [vmem:[#allocation2 + $0x20] sm:$0xf] %v540
    %573 = vst [vmem:[#allocation2 + $0x24] sm:$0xff] %v541
    %574 = vst [vmem:[#allocation2 + $0x2c] sm:$0xf] %v542
    %575 = vst [vmem:[#allocation2 + $0x30] sm:$0xff] %v543
    %576 = vst [vmem:[#allocation2 + $0x38] sm:$0xf] %v544
    %577 = vst [vmem:[#allocation2 + $0x3c] sm:$0xff] %v545
    %578 = vst [vmem:[#allocation2 + $0x44] sm:$0xf] %v546
    %579 = vst [vmem:[#allocation2 + $0x48] sm:$0xff] %v547
    %580 = vst [vmem:[#allocation2 + $0x50] sm:$0xf] %v548
    %581 = vst [vmem:[#allocation2 + $0x54] sm:$0xff] %v549
    %582 = vst [vmem:[#allocation2 + $0x5c] sm:$0xf] %v550
    %583 = vst [vmem:[#allocation2 + $0x60] sm:$0xff] %v551
    %584 = vst [vmem:[#allocation2 + $0x68] sm:$0xf] %v552
    %585 = vst [vmem:[#allocation2 + $0x6c] sm:$0xff] %v553
    %586 = vst [vmem:[#allocation2 + $0x74] sm:$0xf] %v554
    %587 = vst [vmem:[#allocation2 + $0x78] sm:$0xff] %v555
    %588 = vst [vmem:[#allocation2 + $0x80] sm:$0xf] %v556
    %589 = vst [vmem:[#allocation2 + $0x84] sm:$0xff] %v557
    %590 = vst [vmem:[#allocation2 + $0x8c] sm:$0xf] %v558
    %591 = vst [vmem:[#allocation2 + $0x90] sm:$0xff] %v559
    %592 = vst [vmem:[#allocation2 + $0x98] sm:$0xf] %v560
    %593 = vst [vmem:[#allocation2 + $0x9c] sm:$0xff] %v561
    %594 = vst [vmem:[#allocation2 + $0xa4] sm:$0xf] %v562
    %595 = vst [vmem:[#allocation2 + $0xa8] sm:$0xff] %v563
    %596 = vst [vmem:[#allocation2 + $0xb0] sm:$0xf] %v564
    %597 = vst [vmem:[#allocation2 + $0xb4] sm:$0xff] %v565
    %598 = vst [vmem:[#allocation2 + $0xbc] sm:$0xf] %v566
    %v599 = vld [vmem:[#allocation14] sm:$0xff]
    %v600 = vld [vmem:[#allocation14 + $0x8] sm:$0xf]
    %v601 = vld [vmem:[#allocation14 + $0xc] sm:$0xff]
    %v602 = vld [vmem:[#allocation14 + $0x14] sm:$0xf]
    %v603 = vld [vmem:[#allocation14 + $0x18] sm:$0xff]
    %v604 = vld [vmem:[#allocation14 + $0x20] sm:$0xf]
    %v605 = vld [vmem:[#allocation14 + $0x24] sm:$0xff]
    %v606 = vld [vmem:[#allocation14 + $0x2c] sm:$0xf]
    %v607 = vld [vmem:[#allocation14 + $0x30] sm:$0xff]
    %v608 = vld [vmem:[#allocation14 + $0x38] sm:$0xf]
    %v609 = vld [vmem:[#allocation14 + $0x3c] sm:$0xff]
    %v610 = vld [vmem:[#allocation14 + $0x44] sm:$0xf]
    %v611 = vld [vmem:[#allocation14 + $0x48] sm:$0xff]
    %v612 = vld [vmem:[#allocation14 + $0x50] sm:$0xf]
    %v613 = vld [vmem:[#allocation14 + $0x54] sm:$0xff]
    %v614 = vld [vmem:[#allocation14 + $0x5c] sm:$0xf]
    %v615 = vld [vmem:[#allocation14 + $0x60] sm:$0xff]
    %v616 = vld [vmem:[#allocation14 + $0x68] sm:$0xf]
    %v617 = vld [vmem:[#allocation14 + $0x6c] sm:$0xff]
    %v618 = vld [vmem:[#allocation14 + $0x74] sm:$0xf]
    %v619 = vld [vmem:[#allocation14 + $0x78] sm:$0xff]
    %v620 = vld [vmem:[#allocation14 + $0x80] sm:$0xf]
    %v621 = vld [vmem:[#allocation14 + $0x84] sm:$0xff]
    %v622 = vld [vmem:[#allocation14 + $0x8c] sm:$0xf]
    %v623 = vld [vmem:[#allocation14 + $0x90] sm:$0xff]
    %v624 = vld [vmem:[#allocation14 + $0x98] sm:$0xf]
    %v625 = vld [vmem:[#allocation14 + $0x9c] sm:$0xff]
    %v626 = vld [vmem:[#allocation14 + $0xa4] sm:$0xf]
    %v627 = vld [vmem:[#allocation14 + $0xa8] sm:$0xff]
    %v628 = vld [vmem:[#allocation14 + $0xb0] sm:$0xf]
    %v629 = vld [vmem:[#allocation14 + $0xb4] sm:$0xff]
    %v630 = vld [vmem:[#allocation14 + $0xbc] sm:$0xf]
    %v631 = vld [vmem:[%s9] sm:$0x7]
    %v633 = vperm.slane %v631, 0
    %v634 = vperm.slane %v631, 1
    %v635 = vperm.slane %v631, 2
    %v671 = vunpack.c.l.b16 %v599
    %v672 = vunpack.c.h.b16 %v599
    %v673 = vunpack.c.l.b16 %v600
    %v674 = vunpack.c.l.b16 %v601
    %v675 = vunpack.c.h.b16 %v601
    %v676 = vunpack.c.l.b16 %v602
    %v677 = vunpack.c.l.b16 %v603
    %v678 = vunpack.c.h.b16 %v603
    %v679 = vunpack.c.l.b16 %v604
    %v680 = vunpack.c.l.b16 %v605
    %v681 = vunpack.c.h.b16 %v605
    %v682 = vunpack.c.l.b16 %v606
    %v683 = vunpack.c.l.b16 %v607
    %v684 = vunpack.c.h.b16 %v607
    %v685 = vunpack.c.l.b16 %v608
    %v686 = vunpack.c.l.b16 %v609
    %v687 = vunpack.c.h.b16 %v609
    %v688 = vunpack.c.l.b16 %v610
    %v689 = vunpack.c.l.b16 %v611
    %v690 = vunpack.c.h.b16 %v611
    %v691 = vunpack.c.l.b16 %v612
    %v692 = vunpack.c.l.b16 %v613
    %v693 = vunpack.c.h.b16 %v613
    %v694 = vunpack.c.l.b16 %v614
    %v695 = vunpack.c.l.b16 %v615
    %v696 = vunpack.c.h.b16 %v615
    %v697 = vunpack.c.l.b16 %v616
    %v698 = vunpack.c.l.b16 %v617
    %v699 = vunpack.c.h.b16 %v617
    %v700 = vunpack.c.l.b16 %v618
    %v701 = vunpack.c.l.b16 %v619
    %v702 = vunpack.c.h.b16 %v619
    %v703 = vunpack.c.l.b16 %v620
    %v704 = vunpack.c.l.b16 %v621
    %v705 = vunpack.c.h.b16 %v621
    %v706 = vunpack.c.l.b16 %v622
    %v707 = vunpack.c.l.b16 %v623
    %v708 = vunpack.c.h.b16 %v623
    %v709 = vunpack.c.l.b16 %v624
    %v710 = vunpack.c.l.b16 %v625
    %v711 = vunpack.c.h.b16 %v625
    %v712 = vunpack.c.l.b16 %v626
    %v713 = vunpack.c.l.b16 %v627
    %v714 = vunpack.c.h.b16 %v627
    %v715 = vunpack.c.l.b16 %v628
    %v716 = vunpack.c.l.b16 %v629
    %v717 = vunpack.c.h.b16 %v629
    %v718 = vunpack.c.l.b16 %v630
    %v719 = vpack.c.b16 %v674, %v671
    %v720 = vpack.c.b16 %v675, %v672
    %v721 = vpack.c.b16 %v676, %v673
    %v722 = vpack.c.b16 %v680, %v677
    %v723 = vpack.c.b16 %v681, %v678
    %v724 = vpack.c.b16 %v682, %v679
    %v725 = vpack.c.b16 %v686, %v683
    %v726 = vpack.c.b16 %v687, %v684
    %v727 = vpack.c.b16 %v688, %v685
    %v728 = vpack.c.b16 %v692, %v689
    %v729 = vpack.c.b16 %v693, %v690
    %v730 = vpack.c.b16 %v694, %v691
    %v731 = vpack.c.b16 %v698, %v695
    %v732 = vpack.c.b16 %v699, %v696
    %v733 = vpack.c.b16 %v700, %v697
    %v734 = vpack.c.b16 %v704, %v701
    %v735 = vpack.c.b16 %v705, %v702
    %v736 = vpack.c.b16 %v706, %v703
    %v737 = vpack.c.b16 %v710, %v707
    %v738 = vpack.c.b16 %v711, %v708
    %v739 = vpack.c.b16 %v712, %v709
    %v740 = vpack.c.b16 %v716, %v713
    %v741 = vpack.c.b16 %v717, %v714
    %v742 = vpack.c.b16 %v718, %v715
    %767 = vmatpush.bf16.msra.mxu0 %v740
    %768 = vmatpush.bf16.msra.mxu0 %v737
    %769 = vmatpush.bf16.msra.mxu0 %v734
    %770 = vmatpush.bf16.msra.mxu0 %v731
    %771 = vmatpush.bf16.msra.mxu0 %v728
    %772 = vmatpush.bf16.msra.mxu0 %v725
    %773 = vmatpush.bf16.msra.mxu0 %v722
    %774 = vmatpush.bf16.msra.mxu0 %v719
    %775 = vmatmul.bf16.gmra.mxu0 %v244
    %v776 = vpop.f32.mrf.mxu0
    %v777 = vadd.f32 %v633, %v776
    %v778 = vpop.f32.mrf.mxu0
    %v779 = vadd.f32 %v633, %v778
    %780 = vmatmul.bf16.gmra.mxu0 %v245
    %v781 = vpop.f32.mrf.mxu0
    %v782 = vadd.f32 %v633, %v781
    %v783 = vpop.f32.mrf.mxu0
    %v784 = vadd.f32 %v633, %v783
    %785 = vmatmul.bf16.gmra.mxu0 %v246
    %v786 = vpop.f32.mrf.mxu0
    %v787 = vadd.f32 %v633, %v786
    %v788 = vpop.f32.mrf.mxu0
    %v789 = vadd.f32 %v633, %v788
    %790 = vmatmul.bf16.gmra.mxu0 %v247
    %v791 = vpop.f32.mrf.mxu0
    %v792 = vadd.f32 %v633, %v791
    %v793 = vpop.f32.mrf.mxu0
    %v794 = vadd.f32 %v633, %v793
    %795 = vmatmul.bf16.gmra.mxu0 %v248
    %v796 = vpop.f32.mrf.mxu0
    %v797 = vadd.f32 %v633, %v796
    %v798 = vpop.f32.mrf.mxu0
    %v799 = vadd.f32 %v633, %v798
    %800 = vmatmul.bf16.gmra.mxu0 %v249
    %v801 = vpop.f32.mrf.mxu0
    %v802 = vadd.f32 %v633, %v801
    %v803 = vpop.f32.mrf.mxu0
    %v804 = vadd.f32 %v633, %v803
    %805 = vmatmul.bf16.gmra.mxu0 %v250
    %v806 = vpop.f32.mrf.mxu0
    %v807 = vadd.f32 %v633, %v806
    %v808 = vpop.f32.mrf.mxu0
    %v809 = vadd.f32 %v633, %v808
    %810 = vmatmul.bf16.gmra.mxu0 %v251
    %v811 = vpop.f32.mrf.mxu0
    %v812 = vadd.f32 %v633, %v811
    %v813 = vpop.f32.mrf.mxu0
    %v814 = vadd.f32 %v633, %v813
    %815 = vdwg.mxu0
    %816 = vmatpush.bf16.msra.mxu0 %v741
    %817 = vmatpush.bf16.msra.mxu0 %v738
    %818 = vmatpush.bf16.msra.mxu0 %v735
    %819 = vmatpush.bf16.msra.mxu0 %v732
    %820 = vmatpush.bf16.msra.mxu0 %v729
    %821 = vmatpush.bf16.msra.mxu0 %v726
    %822 = vmatpush.bf16.msra.mxu0 %v723
    %823 = vmatpush.bf16.msra.mxu0 %v720
    %824 = vmatmul.bf16.gmra.mxu0 %v244
    %v825 = vpop.f32.mrf.mxu0
    %v826 = vadd.f32 %v634, %v825
    %v827 = vpop.f32.mrf.mxu0
    %v828 = vadd.f32 %v634, %v827
    %829 = vmatmul.bf16.gmra.mxu0 %v245
    %v830 = vpop.f32.mrf.mxu0
    %v831 = vadd.f32 %v634, %v830
    %v832 = vpop.f32.mrf.mxu0
    %v833 = vadd.f32 %v634, %v832
    %834 = vmatmul.bf16.gmra.mxu0 %v246
    %v835 = vpop.f32.mrf.mxu0
    %v836 = vadd.f32 %v634, %v835
    %v837 = vpop.f32.mrf.mxu0
    %v838 = vadd.f32 %v634, %v837
    %839 = vmatmul.bf16.gmra.mxu0 %v247
    %v840 = vpop.f32.mrf.mxu0
    %v841 = vadd.f32 %v634, %v840
    %v842 = vpop.f32.mrf.mxu0
    %v843 = vadd.f32 %v634, %v842
    %844 = vmatmul.bf16.gmra.mxu0 %v248
    %v845 = vpop.f32.mrf.mxu0
    %v846 = vadd.f32 %v634, %v845
    %v847 = vpop.f32.mrf.mxu0
    %v848 = vadd.f32 %v634, %v847
    %849 = vmatmul.bf16.gmra.mxu0 %v249
    %v850 = vpop.f32.mrf.mxu0
    %v851 = vadd.f32 %v634, %v850
    %v852 = vpop.f32.mrf.mxu0
    %v853 = vadd.f32 %v634, %v852
    %854 = vmatmul.bf16.gmra.mxu0 %v250
    %v855 = vpop.f32.mrf.mxu0
    %v856 = vadd.f32 %v634, %v855
    %v857 = vpop.f32.mrf.mxu0
    %v858 = vadd.f32 %v634, %v857
    %859 = vmatmul.bf16.gmra.mxu0 %v251
    %v860 = vpop.f32.mrf.mxu0
    %v861 = vadd.f32 %v634, %v860
    %v862 = vpop.f32.mrf.mxu0
    %v863 = vadd.f32 %v634, %v862
    %864 = vdwg.mxu0
    %865 = vmatpush.bf16.msra.mxu0 %v742
    %866 = vmatpush.bf16.msra.mxu0 %v739
    %867 = vmatpush.bf16.msra.mxu0 %v736
    %868 = vmatpush.bf16.msra.mxu0 %v733
    %869 = vmatpush.bf16.msra.mxu0 %v730
    %870 = vmatpush.bf16.msra.mxu0 %v727
    %871 = vmatpush.bf16.msra.mxu0 %v724
    %872 = vmatpush.bf16.msra.mxu0 %v721
    %873 = vmatmul.bf16.gmra.mxu0 %v244
    %v874 = vpop.f32.mrf.mxu0
    %v875 = vadd.f32 %v635, %v874
    %v876 = vpop.f32.mrf.mxu0
    %v877 = vadd.f32 %v635, %v876
    %878 = vmatmul.bf16.gmra.mxu0 %v245
    %v879 = vpop.f32.mrf.mxu0
    %v880 = vadd.f32 %v635, %v879
    %v881 = vpop.f32.mrf.mxu0
    %v882 = vadd.f32 %v635, %v881
    %883 = vmatmul.bf16.gmra.mxu0 %v246
    %v884 = vpop.f32.mrf.mxu0
    %v885 = vadd.f32 %v635, %v884
    %v886 = vpop.f32.mrf.mxu0
    %v887 = vadd.f32 %v635, %v886
    %888 = vmatmul.bf16.gmra.mxu0 %v247
    %v889 = vpop.f32.mrf.mxu0
    %v890 = vadd.f32 %v635, %v889
    %v891 = vpop.f32.mrf.mxu0
    %v892 = vadd.f32 %v635, %v891
    %893 = vmatmul.bf16.gmra.mxu0 %v248
    %v894 = vpop.f32.mrf.mxu0
    %v895 = vadd.f32 %v635, %v894
    %v896 = vpop.f32.mrf.mxu0
    %v897 = vadd.f32 %v635, %v896
    %898 = vmatmul.bf16.gmra.mxu0 %v249
    %v899 = vpop.f32.mrf.mxu0
    %v900 = vadd.f32 %v635, %v899
    %v901 = vpop.f32.mrf.mxu0
    %v902 = vadd.f32 %v635, %v901
    %903 = vmatmul.bf16.gmra.mxu0 %v250
    %v904 = vpop.f32.mrf.mxu0
    %v905 = vadd.f32 %v635, %v904
    %v906 = vpop.f32.mrf.mxu0
    %v907 = vadd.f32 %v635, %v906
    %908 = vmatmul.bf16.gmra.mxu0 %v251
    %v909 = vpop.f32.mrf.mxu0
    %v910 = vadd.f32 %v635, %v909
    %v911 = vpop.f32.mrf.mxu0
    %v912 = vadd.f32 %v635, %v911
    %913 = vdwg.mxu0
    %v914 = vpack.c.bf16 %v826, %v777
    %v915 = vpack.c.bf16 %v875, %v875
    %v916 = vpack.c.bf16 %v828, %v779
    %v917 = vpack.c.bf16 %v877, %v877
    %v918 = vpack.c.bf16 %v831, %v782
    %v919 = vpack.c.bf16 %v880, %v880
    %v920 = vpack.c.bf16 %v833, %v784
    %v921 = vpack.c.bf16 %v882, %v882
    %v922 = vpack.c.bf16 %v836, %v787
    %v923 = vpack.c.bf16 %v885, %v885
    %v924 = vpack.c.bf16 %v838, %v789
    %v925 = vpack.c.bf16 %v887, %v887
    %v926 = vpack.c.bf16 %v841, %v792
    %v927 = vpack.c.bf16 %v890, %v890
    %v928 = vpack.c.bf16 %v843, %v794
    %v929 = vpack.c.bf16 %v892, %v892
    %v930 = vpack.c.bf16 %v846, %v797
    %v931 = vpack.c.bf16 %v895, %v895
    %v932 = vpack.c.bf16 %v848, %v799
    %v933 = vpack.c.bf16 %v897, %v897
    %v934 = vpack.c.bf16 %v851, %v802
    %v935 = vpack.c.bf16 %v900, %v900
    %v936 = vpack.c.bf16 %v853, %v804
    %v937 = vpack.c.bf16 %v902, %v902
    %v938 = vpack.c.bf16 %v856, %v807
    %v939 = vpack.c.bf16 %v905, %v905
    %v940 = vpack.c.bf16 %v858, %v809
    %v941 = vpack.c.bf16 %v907, %v907
    %v942 = vpack.c.bf16 %v861, %v812
    %v943 = vpack.c.bf16 %v910, %v910
    %v944 = vpack.c.bf16 %v863, %v814
    %v945 = vpack.c.bf16 %v912, %v912
    %946 = vst [vmem:[#allocation3] sm:$0xff] %v914
    %947 = vst [vmem:[#allocation3 + $0x8] sm:$0xf] %v915
    %948 = vst [vmem:[#allocation3 + $0xc] sm:$0xff] %v916
    %949 = vst [vmem:[#allocation3 + $0x14] sm:$0xf] %v917
    %950 = vst [vmem:[#allocation3 + $0x18] sm:$0xff] %v918
    %951 = vst [vmem:[#allocation3 + $0x20] sm:$0xf] %v919
    %952 = vst [vmem:[#allocation3 + $0x24] sm:$0xff] %v920
    %953 = vst [vmem:[#allocation3 + $0x2c] sm:$0xf] %v921
    %954 = vst [vmem:[#allocation3 + $0x30] sm:$0xff] %v922
    %955 = vst [vmem:[#allocation3 + $0x38] sm:$0xf] %v923
    %956 = vst [vmem:[#allocation3 + $0x3c] sm:$0xff] %v924
    %957 = vst [vmem:[#allocation3 + $0x44] sm:$0xf] %v925
    %958 = vst [vmem:[#allocation3 + $0x48] sm:$0xff] %v926
    %959 = vst [vmem:[#allocation3 + $0x50] sm:$0xf] %v927
    %960 = vst [vmem:[#allocation3 + $0x54] sm:$0xff] %v928
    %961 = vst [vmem:[#allocation3 + $0x5c] sm:$0xf] %v929
    %962 = vst [vmem:[#allocation3 + $0x60] sm:$0xff] %v930
    %963 = vst [vmem:[#allocation3 + $0x68] sm:$0xf] %v931
    %964 = vst [vmem:[#allocation3 + $0x6c] sm:$0xff] %v932
    %965 = vst [vmem:[#allocation3 + $0x74] sm:$0xf] %v933
    %966 = vst [vmem:[#allocation3 + $0x78] sm:$0xff] %v934
    %967 = vst [vmem:[#allocation3 + $0x80] sm:$0xf] %v935
    %968 = vst [vmem:[#allocation3 + $0x84] sm:$0xff] %v936
    %969 = vst [vmem:[#allocation3 + $0x8c] sm:$0xf] %v937
    %970 = vst [vmem:[#allocation3 + $0x90] sm:$0xff] %v938
    %971 = vst [vmem:[#allocation3 + $0x98] sm:$0xf] %v939
    %972 = vst [vmem:[#allocation3 + $0x9c] sm:$0xff] %v940
    %973 = vst [vmem:[#allocation3 + $0xa4] sm:$0xf] %v941
    %974 = vst [vmem:[#allocation3 + $0xa8] sm:$0xff] %v942
    %975 = vst [vmem:[#allocation3 + $0xb0] sm:$0xf] %v943
    %976 = vst [vmem:[#allocation3 + $0xb4] sm:$0xff] %v944
    %977 = vst [vmem:[#allocation3 + $0xbc] sm:$0xf] %v945
    %978 = vst [vmem:[#allocation4] sm:$0xff] 0.0
    %979 = vst [vmem:[#allocation4 + $0x8] sm:$0xff] 0.0
    %980 = vst [vmem:[#allocation5] sm:$0xff] 0.0
    %981 = vst [vmem:[#allocation5 + $0x8] sm:$0xff] 0.0
    %v982 = vld [vmem:[%s2] sm:$0xff]
    %v983 = vld [vmem:[%s2 + $0x8] sm:$0xff]
    %s984 = sld [smem:[#allocation7]]
    // While loop
    $region82: #{tpu_custom_call.1} parent=1 // loop_pre_header
      _
    $region83: #{tpu_custom_call.1} parent=1 // loop_header
      %s986 = sphi 0, %s988
      %p987 = scmp.ge.s32.totalorder %s986, %s984
    $region84: #{tpu_custom_call.1} parent=1 // loop_header_branch
      %990 = sbr.rel (%p987) target = $region88
    $region85: #{tpu_custom_call.1} parent=1 // loop_body
      %s991 = smul.u32 %s986, 6
      %s992 = smul.addr %s991, 4
      %s993 = scalar_lea.vmem [#allocation2], %s992
      %v994 = vld [vmem:[%s993] sm:$0xff]
      %v995 = vld [vmem:[%s993 + $0x8] sm:$0xf]
      %v996 = vld [vmem:[%s993 + $0xc] sm:$0xff]
      %v997 = vld [vmem:[%s993 + $0x14] sm:$0xf]
      %v998 = vld [vmem:[#allocation4] sm:$0xff]
      %v999 = vld [vmem:[#allocation4 + $0x8] sm:$0xff]
      %v1000 = vstv %s986
      %vm1001 = vcmp.gt.s32.totalorder %v982, %v1000
      %vm1002 = vcmp.gt.s32.totalorder %v983, %v1000
      %v1003 = vpack.c.bf16 %v999, %v998
      %v1004 = vld [vmem:[#allocation13] sm:$0xff]
      %v1005 = vld [vmem:[#allocation13 + $0x8] sm:$0xf]
      %v1006 = vld [vmem:[#allocation13 + $0xc] sm:$0xff]
      %v1007 = vld [vmem:[#allocation13 + $0x14] sm:$0xf]
      %v1008 = vld [vmem:[#allocation13 + $0x18] sm:$0xff]
      %v1009 = vld [vmem:[#allocation13 + $0x20] sm:$0xf]
      %v1010 = vld [vmem:[#allocation13 + $0x24] sm:$0xff]
      %v1011 = vld [vmem:[#allocation13 + $0x2c] sm:$0xf]
      %v1012 = vld [vmem:[#allocation13 + $0x30] sm:$0xff]
      %v1013 = vld [vmem:[#allocation13 + $0x38] sm:$0xf]
      %v1014 = vld [vmem:[#allocation13 + $0x3c] sm:$0xff]
      %v1015 = vld [vmem:[#allocation13 + $0x44] sm:$0xf]
      %v1016 = vld [vmem:[#allocation13 + $0x48] sm:$0xff]
      %v1017 = vld [vmem:[#allocation13 + $0x50] sm:$0xf]
      %v1018 = vld [vmem:[#allocation13 + $0x54] sm:$0xff]
      %v1019 = vld [vmem:[#allocation13 + $0x5c] sm:$0xf]
      %v1020 = vld [vmem:[#allocation13 + $0x60] sm:$0xff]
      %v1021 = vld [vmem:[#allocation13 + $0x68] sm:$0xf]
      %v1022 = vld [vmem:[#allocation13 + $0x6c] sm:$0xff]
      %v1023 = vld [vmem:[#allocation13 + $0x74] sm:$0xf]
      %v1024 = vld [vmem:[#allocation13 + $0x78] sm:$0xff]
      %v1025 = vld [vmem:[#allocation13 + $0x80] sm:$0xf]
      %v1026 = vld [vmem:[#allocation13 + $0x84] sm:$0xff]
      %v1027 = vld [vmem:[#allocation13 + $0x8c] sm:$0xf]
      %v1028 = vld [vmem:[#allocation13 + $0x90] sm:$0xff]
      %v1029 = vld [vmem:[#allocation13 + $0x98] sm:$0xf]
      %v1030 = vld [vmem:[#allocation13 + $0x9c] sm:$0xff]
      %v1031 = vld [vmem:[#allocation13 + $0xa4] sm:$0xf]
      %v1032 = vld [vmem:[#allocation13 + $0xa8] sm:$0xff]
      %v1033 = vld [vmem:[#allocation13 + $0xb0] sm:$0xf]
      %v1034 = vld [vmem:[#allocation13 + $0xb4] sm:$0xff]
      %v1035 = vld [vmem:[#allocation13 + $0xbc] sm:$0xf]
      %v1068 = vunpack.c.l.b16 %v1004
      %v1069 = vunpack.c.h.b16 %v1004
      %v1070 = vunpack.c.l.b16 %v1005
      %v1071 = vunpack.c.l.b16 %v1006
      %v1072 = vunpack.c.h.b16 %v1006
      %v1073 = vunpack.c.l.b16 %v1007
      %v1074 = vunpack.c.l.b16 %v1008
      %v1075 = vunpack.c.h.b16 %v1008
      %v1076 = vunpack.c.l.b16 %v1009
      %v1077 = vunpack.c.l.b16 %v1010
      %v1078 = vunpack.c.h.b16 %v1010
      %v1079 = vunpack.c.l.b16 %v1011
      %v1080 = vunpack.c.l.b16 %v1012
      %v1081 = vunpack.c.h.b16 %v1012
      %v1082 = vunpack.c.l.b16 %v1013
      %v1083 = vunpack.c.l.b16 %v1014
      %v1084 = vunpack.c.h.b16 %v1014
      %v1085 = vunpack.c.l.b16 %v1015
      %v1086 = vunpack.c.l.b16 %v1016
      %v1087 = vunpack.c.h.b16 %v1016
      %v1088 = vunpack.c.l.b16 %v1017
      %v1089 = vunpack.c.l.b16 %v1018
      %v1090 = vunpack.c.h.b16 %v1018
      %v1091 = vunpack.c.l.b16 %v1019
      %v1092 = vunpack.c.l.b16 %v1020
      %v1093 = vunpack.c.h.b16 %v1020
      %v1094 = vunpack.c.l.b16 %v1021
      %v1095 = vunpack.c.l.b16 %v1022
      %v1096 = vunpack.c.h.b16 %v1022
      %v1097 = vunpack.c.l.b16 %v1023
      %v1098 = vunpack.c.l.b16 %v1024
      %v1099 = vunpack.c.h.b16 %v1024
      %v1100 = vunpack.c.l.b16 %v1025
      %v1101 = vunpack.c.l.b16 %v1026
      %v1102 = vunpack.c.h.b16 %v1026
      %v1103 = vunpack.c.l.b16 %v1027
      %v1104 = vunpack.c.l.b16 %v1028
      %v1105 = vunpack.c.h.b16 %v1028
      %v1106 = vunpack.c.l.b16 %v1029
      %v1107 = vunpack.c.l.b16 %v1030
      %v1108 = vunpack.c.h.b16 %v1030
      %v1109 = vunpack.c.l.b16 %v1031
      %v1110 = vunpack.c.l.b16 %v1032
      %v1111 = vunpack.c.h.b16 %v1032
      %v1112 = vunpack.c.l.b16 %v1033
      %v1113 = vunpack.c.l.b16 %v1034
      %v1114 = vunpack.c.h.b16 %v1034
      %v1115 = vunpack.c.l.b16 %v1035
      %v1116 = vpack.c.b16 %v1071, %v1068
      %v1117 = vpack.c.b16 %v1072, %v1069
      %v1118 = vpack.c.b16 %v1073, %v1070
      %v1119 = vpack.c.b16 %v1077, %v1074
      %v1120 = vpack.c.b16 %v1078, %v1075
      %v1121 = vpack.c.b16 %v1079, %v1076
      %v1122 = vpack.c.b16 %v1083, %v1080
      %v1123 = vpack.c.b16 %v1084, %v1081
      %v1124 = vpack.c.b16 %v1085, %v1082
      %v1125 = vpack.c.b16 %v1089, %v1086
      %v1126 = vpack.c.b16 %v1090, %v1087
      %v1127 = vpack.c.b16 %v1091, %v1088
      %v1128 = vpack.c.b16 %v1095, %v1092
      %v1129 = vpack.c.b16 %v1096, %v1093
      %v1130 = vpack.c.b16 %v1097, %v1094
      %v1131 = vpack.c.b16 %v1101, %v1098
      %v1132 = vpack.c.b16 %v1102, %v1099
      %v1133 = vpack.c.b16 %v1103, %v1100
      %v1134 = vpack.c.b16 %v1107, %v1104
      %v1135 = vpack.c.b16 %v1108, %v1105
      %v1136 = vpack.c.b16 %v1109, %v1106
      %v1137 = vpack.c.b16 %v1113, %v1110
      %v1138 = vpack.c.b16 %v1114, %v1111
      %v1139 = vpack.c.b16 %v1115, %v1112
      %1164 = vmatpush.bf16.msra.mxu0 %v1137
      %1165 = vmatpush.bf16.msra.mxu0 %v1134
      %1166 = vmatpush.bf16.msra.mxu0 %v1131
      %1167 = vmatpush.bf16.msra.mxu0 %v1128
      %1168 = vmatpush.bf16.msra.mxu0 %v1125
      %1169 = vmatpush.bf16.msra.mxu0 %v1122
      %1170 = vmatpush.bf16.msra.mxu0 %v1119
      %1171 = vmatpush.bf16.msra.mxu0 %v1116
      %1172 = vmatmul.bf16.gmra.mxu0 %v1003
      %v1173 = vpop.f32.mrf.mxu0
      %v1174 = vadd.f32 0.0, %v1173
      %v1175 = vpop.f32.mrf.mxu0
      %v1176 = vadd.f32 0.0, %v1175
      %1177 = vdwg.mxu0
      %1178 = vmatpush.bf16.msra.mxu0 %v1138
      %1179 = vmatpush.bf16.msra.mxu0 %v1135
      %1180 = vmatpush.bf16.msra.mxu0 %v1132
      %1181 = vmatpush.bf16.msra.mxu0 %v1129
      %1182 = vmatpush.bf16.msra.mxu0 %v1126
      %1183 = vmatpush.bf16.msra.mxu0 %v1123
      %1184 = vmatpush.bf16.msra.mxu0 %v1120
      %1185 = vmatpush.bf16.msra.mxu0 %v1117
      %1186 = vmatmul.bf16.gmra.mxu0 %v1003
      %v1187 = vpop.f32.mrf.mxu0
      %v1188 = vadd.f32 0.0, %v1187
      %v1189 = vpop.f32.mrf.mxu0
      %v1190 = vadd.f32 0.0, %v1189
      %1191 = vdwg.mxu0
      %1192 = vmatpush.bf16.msra.mxu0 %v1139
      %1193 = vmatpush.bf16.msra.mxu0 %v1136
      %1194 = vmatpush.bf16.msra.mxu0 %v1133
      %1195 = vmatpush.bf16.msra.mxu0 %v1130
      %1196 = vmatpush.bf16.msra.mxu0 %v1127
      %1197 = vmatpush.bf16.msra.mxu0 %v1124
      %1198 = vmatpush.bf16.msra.mxu0 %v1121
      %1199 = vmatpush.bf16.msra.mxu0 %v1118
      %1200 = vmatmul.bf16.gmra.mxu0 %v1003
      %v1201 = vpop.f32.mrf.mxu0
      %v1202 = vadd.f32 0.0, %v1201
      %v1203 = vpop.f32.mrf.mxu0
      %v1204 = vadd.f32 0.0, %v1203
      %1205 = vdwg.mxu0
      %v1206 = vunpack.c.l.bf16 %v994
      %v1207 = vunpack.c.l.bf16 %v996
      %v1208 = vadd.f32 %v1206, %v1174
      %v1209 = vadd.f32 %v1207, %v1176
      %v1210 = vxor.u32 %v1208, 2147483648
      %v1211 = vxor.u32 %v1209, 2147483648
      %v1212 = vmul.f32 %v1210, 1.442695
      %v1213 = vpow.pop %v1212
      %v1214 = vmul.f32 %v1211, 1.442695
      %v1215 = vpow.pop %v1214
      %v1216 = vadd.f32 %v1213, 1.0
      %v1217 = vadd.f32 %v1215, 1.0
      %v1218 = vrcp.pop %v1216
      %v1219 = vmul.f32 %v1216, %v1218
      %v1220 = vsub.f32 1.0, %v1219
      %v1221 = vmul.f32 %v1218, %v1220
      %v1222 = vadd.f32 %v1218, %v1221
      %vm1223 = vweird.f32 %v1216
      %vm1224 = vweird.f32 %v1218
      %vm1225 = vmor %vm1223, %vm1224
      %v1226 = vsel %vm1225, %v1218, %v1222
      %v1227 = vand.u32 2147483647, %v1216
      %vm1228 = vcmp.eq.f32.partialorder %v1227, 8.507059e+37
      %v1229 = vand.u32 %v1216, 2147483648
      %v1230 = vor.u32 1.1754944e-38, %v1229
      %v1231 = vsel %vm1228, %v1230, %v1226
      %v1232 = vmul.f32 1.0, %v1231
      %v1233 = vrcp.pop %v1217
      %v1234 = vmul.f32 %v1217, %v1233
      %v1235 = vsub.f32 1.0, %v1234
      %v1236 = vmul.f32 %v1233, %v1235
      %v1237 = vadd.f32 %v1233, %v1236
      %vm1238 = vweird.f32 %v1217
      %vm1239 = vweird.f32 %v1233
      %vm1240 = vmor %vm1238, %vm1239
      %v1241 = vsel %vm1240, %v1233, %v1237
      %v1242 = vand.u32 2147483647, %v1217
      %vm1243 = vcmp.eq.f32.partialorder %v1242, 8.507059e+37
      %v1244 = vand.u32 %v1217, 2147483648
      %v1245 = vor.u32 1.1754944e-38, %v1244
      %v1246 = vsel %vm1243, %v1245, %v1241
      %v1247 = vmul.f32 1.0, %v1246
      %v1250 = vrot.slane %v994, 4
      %v1251 = vrot.slane %v996, 4
      %v1254 = vunpack.c.l.bf16 %v1250
      %v1255 = vunpack.c.l.bf16 %v1251
      %v1256 = vadd.f32 %v1254, %v1188
      %v1257 = vadd.f32 %v1255, %v1190
      %v1258 = vxor.u32 %v1256, 2147483648
      %v1259 = vxor.u32 %v1257, 2147483648
      %v1260 = vmul.f32 %v1258, 1.442695
      %v1261 = vpow.pop %v1260
      %v1262 = vmul.f32 %v1259, 1.442695
      %v1263 = vpow.pop %v1262
      %v1264 = vadd.f32 %v1261, 1.0
      %v1265 = vadd.f32 %v1263, 1.0
      %v1266 = vrcp.pop %v1264
      %v1267 = vmul.f32 %v1264, %v1266
      %v1268 = vsub.f32 1.0, %v1267
      %v1269 = vmul.f32 %v1266, %v1268
      %v1270 = vadd.f32 %v1266, %v1269
      %vm1271 = vweird.f32 %v1264
      %vm1272 = vweird.f32 %v1266
      %vm1273 = vmor %vm1271, %vm1272
      %v1274 = vsel %vm1273, %v1266, %v1270
      %v1275 = vand.u32 2147483647, %v1264
      %vm1276 = vcmp.eq.f32.partialorder %v1275, 8.507059e+37
      %v1277 = vand.u32 %v1264, 2147483648
      %v1278 = vor.u32 1.1754944e-38, %v1277
      %v1279 = vsel %vm1276, %v1278, %v1274
      %v1280 = vmul.f32 1.0, %v1279
      %v1281 = vrcp.pop %v1265
      %v1282 = vmul.f32 %v1265, %v1281
      %v1283 = vsub.f32 1.0, %v1282
      %v1284 = vmul.f32 %v1281, %v1283
      %v1285 = vadd.f32 %v1281, %v1284
      %vm1286 = vweird.f32 %v1265
      %vm1287 = vweird.f32 %v1281
      %vm1288 = vmor %vm1286, %vm1287
      %v1289 = vsel %vm1288, %v1281, %v1285
      %v1290 = vand.u32 2147483647, %v1265
      %vm1291 = vcmp.eq.f32.partialorder %v1290, 8.507059e+37
      %v1292 = vand.u32 %v1265, 2147483648
      %v1293 = vor.u32 1.1754944e-38, %v1292
      %v1294 = vsel %vm1291, %v1293, %v1289
      %v1295 = vmul.f32 1.0, %v1294
      %v1296 = vld [vmem:[%s6] sm:$0x1]
      %v1298 = vperm.slane %v1296, 0
      %v1300 = vadd.f32 %v1202, %v1298
      %v1301 = vadd.f32 %v1204, %v1298
      %v1302 = vmul.f32 %v1232, %v1300
      %v1303 = vmul.f32 %v1247, %v1301
      %v1304 = vunpack.c.l.bf16 %v995
      %v1305 = vunpack.c.l.bf16 %v997
      %v1306 = vadd.f32 %v1304, %v1302
      %v1307 = vadd.f32 %v1305, %v1303
      %v1308 = vtanh.pop %v1306
      %v1309 = vtanh.pop %v1307
      %v1310 = vsub.f32 1.0, %v1280
      %v1311 = vsub.f32 1.0, %v1295
      %v1312 = vmul.f32 %v1310, %v1308
      %v1313 = vmul.f32 %v1311, %v1309
      %v1314 = vmul.f32 %v1280, %v998
      %v1315 = vmul.f32 %v1295, %v999
      %v1316 = vadd.f32 %v1312, %v1314
      %v1317 = vadd.f32 %v1313, %v1315
      %v1318 = vsel %vm1001, 1, 0
      %v1319 = vsel %vm1002, 1, 0
      %1320 = vset.pattern.permute.xlu0 0
      %1321 = vperm.xlu0 %1320, %v1318
      %v1322 = vpop.permute.xlu0 %1321
      %1323 = vset.pattern.permute.xlu0 0
      %1324 = vperm.xlu0 %1323, %v1319
      %v1325 = vpop.permute.xlu0 %1324
      %vm1326 = vcmp.eq.s32.totalorder %v1322, 1
      %vm1327 = vcmp.eq.s32.totalorder %v1325, 1
      %v1328 = vsel %vm1326, %v1316, %v998
      %v1329 = vsel %vm1327, %v1317, %v999
      %1330 = vst [vmem:[#allocation4] sm:$0xff] %v1328
      %1331 = vst [vmem:[#allocation4 + $0x8] sm:$0xff] %v1329
      %s1332 = ssub.s32 %s984, 1
      %s1333 = ssub.s32 %s1332, %s986
      %s1334 = smul.u32 %s1333, 6
      %s1335 = smul.addr %s1334, 4
      %s1336 = scalar_lea.vmem [#allocation3], %s1335
      %v1337 = vld [vmem:[%s1336] sm:$0xff]
      %v1338 = vld [vmem:[%s1336 + $0x8] sm:$0xf]
      %v1339 = vld [vmem:[%s1336 + $0xc] sm:$0xff]
      %v1340 = vld [vmem:[%s1336 + $0x14] sm:$0xf]
      %v1341 = vld [vmem:[#allocation5] sm:$0xff]
      %v1342 = vld [vmem:[#allocation5 + $0x8] sm:$0xff]
      %v1343 = vstv %s1333
      %vm1344 = vcmp.gt.s32.totalorder %v982, %v1343
      %vm1345 = vcmp.gt.s32.totalorder %v983, %v1343
      %v1346 = vpack.c.bf16 %v1342, %v1341
      %v1347 = vld [vmem:[#allocation16] sm:$0xff]
      %v1348 = vld [vmem:[#allocation16 + $0x8] sm:$0xf]
      %v1349 = vld [vmem:[#allocation16 + $0xc] sm:$0xff]
      %v1350 = vld [vmem:[#allocation16 + $0x14] sm:$0xf]
      %v1351 = vld [vmem:[#allocation16 + $0x18] sm:$0xff]
      %v1352 = vld [vmem:[#allocation16 + $0x20] sm:$0xf]
      %v1353 = vld [vmem:[#allocation16 + $0x24] sm:$0xff]
      %v1354 = vld [vmem:[#allocation16 + $0x2c] sm:$0xf]
      %v1355 = vld [vmem:[#allocation16 + $0x30] sm:$0xff]
      %v1356 = vld [vmem:[#allocation16 + $0x38] sm:$0xf]
      %v1357 = vld [vmem:[#allocation16 + $0x3c] sm:$0xff]
      %v1358 = vld [vmem:[#allocation16 + $0x44] sm:$0xf]
      %v1359 = vld [vmem:[#allocation16 + $0x48] sm:$0xff]
      %v1360 = vld [vmem:[#allocation16 + $0x50] sm:$0xf]
      %v1361 = vld [vmem:[#allocation16 + $0x54] sm:$0xff]
      %v1362 = vld [vmem:[#allocation16 + $0x5c] sm:$0xf]
      %v1363 = vld [vmem:[#allocation16 + $0x60] sm:$0xff]
      %v1364 = vld [vmem:[#allocation16 + $0x68] sm:$0xf]
      %v1365 = vld [vmem:[#allocation16 + $0x6c] sm:$0xff]
      %v1366 = vld [vmem:[#allocation16 + $0x74] sm:$0xf]
      %v1367 = vld [vmem:[#allocation16 + $0x78] sm:$0xff]
      %v1368 = vld [vmem:[#allocation16 + $0x80] sm:$0xf]
      %v1369 = vld [vmem:[#allocation16 + $0x84] sm:$0xff]
      %v1370 = vld [vmem:[#allocation16 + $0x8c] sm:$0xf]
      %v1371 = vld [vmem:[#allocation16 + $0x90] sm:$0xff]
      %v1372 = vld [vmem:[#allocation16 + $0x98] sm:$0xf]
      %v1373 = vld [vmem:[#allocation16 + $0x9c] sm:$0xff]
      %v1374 = vld [vmem:[#allocation16 + $0xa4] sm:$0xf]
      %v1375 = vld [vmem:[#allocation16 + $0xa8] sm:$0xff]
      %v1376 = vld [vmem:[#allocation16 + $0xb0] sm:$0xf]
      %v1377 = vld [vmem:[#allocation16 + $0xb4] sm:$0xff]
      %v1378 = vld [vmem:[#allocation16 + $0xbc] sm:$0xf]
      %v1411 = vunpack.c.l.b16 %v1347
      %v1412 = vunpack.c.h.b16 %v1347
      %v1413 = vunpack.c.l.b16 %v1348
      %v1414 = vunpack.c.l.b16 %v1349
      %v1415 = vunpack.c.h.b16 %v1349
      %v1416 = vunpack.c.l.b16 %v1350
      %v1417 = vunpack.c.l.b16 %v1351
      %v1418 = vunpack.c.h.b16 %v1351
      %v1419 = vunpack.c.l.b16 %v1352
      %v1420 = vunpack.c.l.b16 %v1353
      %v1421 = vunpack.c.h.b16 %v1353
      %v1422 = vunpack.c.l.b16 %v1354
      %v1423 = vunpack.c.l.b16 %v1355
      %v1424 = vunpack.c.h.b16 %v1355
      %v1425 = vunpack.c.l.b16 %v1356
      %v1426 = vunpack.c.l.b16 %v1357
      %v1427 = vunpack.c.h.b16 %v1357
      %v1428 = vunpack.c.l.b16 %v1358
      %v1429 = vunpack.c.l.b16 %v1359
      %v1430 = vunpack.c.h.b16 %v1359
      %v1431 = vunpack.c.l.b16 %v1360
      %v1432 = vunpack.c.l.b16 %v1361
      %v1433 = vunpack.c.h.b16 %v1361
      %v1434 = vunpack.c.l.b16 %v1362
      %v1435 = vunpack.c.l.b16 %v1363
      %v1436 = vunpack.c.h.b16 %v1363
      %v1437 = vunpack.c.l.b16 %v1364
      %v1438 = vunpack.c.l.b16 %v1365
      %v1439 = vunpack.c.h.b16 %v1365
      %v1440 = vunpack.c.l.b16 %v1366
      %v1441 = vunpack.c.l.b16 %v1367
      %v1442 = vunpack.c.h.b16 %v1367
      %v1443 = vunpack.c.l.b16 %v1368
      %v1444 = vunpack.c.l.b16 %v1369
      %v1445 = vunpack.c.h.b16 %v1369
      %v1446 = vunpack.c.l.b16 %v1370
      %v1447 = vunpack.c.l.b16 %v1371
      %v1448 = vunpack.c.h.b16 %v1371
      %v1449 = vunpack.c.l.b16 %v1372
      %v1450 = vunpack.c.l.b16 %v1373
      %v1451 = vunpack.c.h.b16 %v1373
      %v1452 = vunpack.c.l.b16 %v1374
      %v1453 = vunpack.c.l.b16 %v1375
      %v1454 = vunpack.c.h.b16 %v1375
      %v1455 = vunpack.c.l.b16 %v1376
      %v1456 = vunpack.c.l.b16 %v1377
      %v1457 = vunpack.c.h.b16 %v1377
      %v1458 = vunpack.c.l.b16 %v1378
      %v1459 = vpack.c.b16 %v1414, %v1411
      %v1460 = vpack.c.b16 %v1415, %v1412
      %v1461 = vpack.c.b16 %v1416, %v1413
      %v1462 = vpack.c.b16 %v1420, %v1417
      %v1463 = vpack.c.b16 %v1421, %v1418
      %v1464 = vpack.c.b16 %v1422, %v1419
      %v1465 = vpack.c.b16 %v1426, %v1423
      %v1466 = vpack.c.b16 %v1427, %v1424
      %v1467 = vpack.c.b16 %v1428, %v1425
      %v1468 = vpack.c.b16 %v1432, %v1429
      %v1469 = vpack.c.b16 %v1433, %v1430
      %v1470 = vpack.c.b16 %v1434, %v1431
      %v1471 = vpack.c.b16 %v1438, %v1435
      %v1472 = vpack.c.b16 %v1439, %v1436
      %v1473 = vpack.c.b16 %v1440, %v1437
      %v1474 = vpack.c.b16 %v1444, %v1441
      %v1475 = vpack.c.b16 %v1445, %v1442
      %v1476 = vpack.c.b16 %v1446, %v1443
      %v1477 = vpack.c.b16 %v1450, %v1447
      %v1478 = vpack.c.b16 %v1451, %v1448
      %v1479 = vpack.c.b16 %v1452, %v1449
      %v1480 = vpack.c.b16 %v1456, %v1453
      %v1481 = vpack.c.b16 %v1457, %v1454
      %v1482 = vpack.c.b16 %v1458, %v1455
      %1507 = vmatpush.bf16.msra.mxu0 %v1480
      %1508 = vmatpush.bf16.msra.mxu0 %v1477
      %1509 = vmatpush.bf16.msra.mxu0 %v1474
      %1510 = vmatpush.bf16.msra.mxu0 %v1471
      %1511 = vmatpush.bf16.msra.mxu0 %v1468
      %1512 = vmatpush.bf16.msra.mxu0 %v1465
      %1513 = vmatpush.bf16.msra.mxu0 %v1462
      %1514 = vmatpush.bf16.msra.mxu0 %v1459
      %1515 = vmatmul.bf16.gmra.mxu0 %v1346
      %v1516 = vpop.f32.mrf.mxu0
      %v1517 = vadd.f32 0.0, %v1516
      %v1518 = vpop.f32.mrf.mxu0
      %v1519 = vadd.f32 0.0, %v1518
      %1520 = vdwg.mxu0
      %1521 = vmatpush.bf16.msra.mxu0 %v1481
      %1522 = vmatpush.bf16.msra.mxu0 %v1478
      %1523 = vmatpush.bf16.msra.mxu0 %v1475
      %1524 = vmatpush.bf16.msra.mxu0 %v1472
      %1525 = vmatpush.bf16.msra.mxu0 %v1469
      %1526 = vmatpush.bf16.msra.mxu0 %v1466
      %1527 = vmatpush.bf16.msra.mxu0 %v1463
      %1528 = vmatpush.bf16.msra.mxu0 %v1460
      %1529 = vmatmul.bf16.gmra.mxu0 %v1346
      %v1530 = vpop.f32.mrf.mxu0
      %v1531 = vadd.f32 0.0, %v1530
      %v1532 = vpop.f32.mrf.mxu0
      %v1533 = vadd.f32 0.0, %v1532
      %1534 = vdwg.mxu0
      %1535 = vmatpush.bf16.msra.mxu0 %v1482
      %1536 = vmatpush.bf16.msra.mxu0 %v1479
      %1537 = vmatpush.bf16.msra.mxu0 %v1476
      %1538 = vmatpush.bf16.msra.mxu0 %v1473
      %1539 = vmatpush.bf16.msra.mxu0 %v1470
      %1540 = vmatpush.bf16.msra.mxu0 %v1467
      %1541 = vmatpush.bf16.msra.mxu0 %v1464
      %1542 = vmatpush.bf16.msra.mxu0 %v1461
      %1543 = vmatmul.bf16.gmra.mxu0 %v1346
      %v1544 = vpop.f32.mrf.mxu0
      %v1545 = vadd.f32 0.0, %v1544
      %v1546 = vpop.f32.mrf.mxu0
      %v1547 = vadd.f32 0.0, %v1546
      %1548 = vdwg.mxu0
      %v1549 = vunpack.c.l.bf16 %v1337
      %v1550 = vunpack.c.l.bf16 %v1339
      %v1551 = vadd.f32 %v1549, %v1517
      %v1552 = vadd.f32 %v1550, %v1519
      %v1553 = vxor.u32 %v1551, 2147483648
      %v1554 = vxor.u32 %v1552, 2147483648
      %v1555 = vmul.f32 %v1553, 1.442695
      %v1556 = vpow.pop %v1555
      %v1557 = vmul.f32 %v1554, 1.442695
      %v1558 = vpow.pop %v1557
      %v1559 = vadd.f32 %v1556, 1.0
      %v1560 = vadd.f32 %v1558, 1.0
      %v1561 = vrcp.pop %v1559
      %v1562 = vmul.f32 %v1559, %v1561
      %v1563 = vsub.f32 1.0, %v1562
      %v1564 = vmul.f32 %v1561, %v1563
      %v1565 = vadd.f32 %v1561, %v1564
      %vm1566 = vweird.f32 %v1559
      %vm1567 = vweird.f32 %v1561
      %vm1568 = vmor %vm1566, %vm1567
      %v1569 = vsel %vm1568, %v1561, %v1565
      %v1570 = vand.u32 2147483647, %v1559
      %vm1571 = vcmp.eq.f32.partialorder %v1570, 8.507059e+37
      %v1572 = vand.u32 %v1559, 2147483648
      %v1573 = vor.u32 1.1754944e-38, %v1572
      %v1574 = vsel %vm1571, %v1573, %v1569
      %v1575 = vmul.f32 1.0, %v1574
      %v1576 = vrcp.pop %v1560
      %v1577 = vmul.f32 %v1560, %v1576
      %v1578 = vsub.f32 1.0, %v1577
      %v1579 = vmul.f32 %v1576, %v1578
      %v1580 = vadd.f32 %v1576, %v1579
      %vm1581 = vweird.f32 %v1560
      %vm1582 = vweird.f32 %v1576
      %vm1583 = vmor %vm1581, %vm1582
      %v1584 = vsel %vm1583, %v1576, %v1580
      %v1585 = vand.u32 2147483647, %v1560
      %vm1586 = vcmp.eq.f32.partialorder %v1585, 8.507059e+37
      %v1587 = vand.u32 %v1560, 2147483648
      %v1588 = vor.u32 1.1754944e-38, %v1587
      %v1589 = vsel %vm1586, %v1588, %v1584
      %v1590 = vmul.f32 1.0, %v1589
      %v1593 = vrot.slane %v1337, 4
      %v1594 = vrot.slane %v1339, 4
      %v1597 = vunpack.c.l.bf16 %v1593
      %v1598 = vunpack.c.l.bf16 %v1594
      %v1599 = vadd.f32 %v1597, %v1531
      %v1600 = vadd.f32 %v1598, %v1533
      %v1601 = vxor.u32 %v1599, 2147483648
      %v1602 = vxor.u32 %v1600, 2147483648
      %v1603 = vmul.f32 %v1601, 1.442695
      %v1604 = vpow.pop %v1603
      %v1605 = vmul.f32 %v1602, 1.442695
      %v1606 = vpow.pop %v1605
      %v1607 = vadd.f32 %v1604, 1.0
      %v1608 = vadd.f32 %v1606, 1.0
      %v1609 = vrcp.pop %v1607
      %v1610 = vmul.f32 %v1607, %v1609
      %v1611 = vsub.f32 1.0, %v1610
      %v1612 = vmul.f32 %v1609, %v1611
      %v1613 = vadd.f32 %v1609, %v1612
      %vm1614 = vweird.f32 %v1607
      %vm1615 = vweird.f32 %v1609
      %vm1616 = vmor %vm1614, %vm1615
      %v1617 = vsel %vm1616, %v1609, %v1613
      %v1618 = vand.u32 2147483647, %v1607
      %vm1619 = vcmp.eq.f32.partialorder %v1618, 8.507059e+37
      %v1620 = vand.u32 %v1607, 2147483648
      %v1621 = vor.u32 1.1754944e-38, %v1620
      %v1622 = vsel %vm1619, %v1621, %v1617
      %v1623 = vmul.f32 1.0, %v1622
      %v1624 = vrcp.pop %v1608
      %v1625 = vmul.f32 %v1608, %v1624
      %v1626 = vsub.f32 1.0, %v1625
      %v1627 = vmul.f32 %v1624, %v1626
      %v1628 = vadd.f32 %v1624, %v1627
      %vm1629 = vweird.f32 %v1608
      %vm1630 = vweird.f32 %v1624
      %vm1631 = vmor %vm1629, %vm1630
      %v1632 = vsel %vm1631, %v1624, %v1628
      %v1633 = vand.u32 2147483647, %v1608
      %vm1634 = vcmp.eq.f32.partialorder %v1633, 8.507059e+37
      %v1635 = vand.u32 %v1608, 2147483648
      %v1636 = vor.u32 1.1754944e-38, %v1635
      %v1637 = vsel %vm1634, %v1636, %v1632
      %v1638 = vmul.f32 1.0, %v1637
      %v1639 = vld [vmem:[%s10] sm:$0x1]
      %v1641 = vperm.slane %v1639, 0
      %v1643 = vadd.f32 %v1545, %v1641
      %v1644 = vadd.f32 %v1547, %v1641
      %v1645 = vmul.f32 %v1575, %v1643
      %v1646 = vmul.f32 %v1590, %v1644
      %v1647 = vunpack.c.l.bf16 %v1338
      %v1648 = vunpack.c.l.bf16 %v1340
      %v1649 = vadd.f32 %v1647, %v1645
      %v1650 = vadd.f32 %v1648, %v1646
      %v1651 = vtanh.pop %v1649
      %v1652 = vtanh.pop %v1650
      %v1653 = vsub.f32 1.0, %v1623
      %v1654 = vsub.f32 1.0, %v1638
      %v1655 = vmul.f32 %v1653, %v1651
      %v1656 = vmul.f32 %v1654, %v1652
      %v1657 = vmul.f32 %v1623, %v1341
      %v1658 = vmul.f32 %v1638, %v1342
      %v1659 = vadd.f32 %v1655, %v1657
      %v1660 = vadd.f32 %v1656, %v1658
      %v1661 = vsel %vm1344, 1, 0
      %v1662 = vsel %vm1345, 1, 0
      %1663 = vset.pattern.permute.xlu0 0
      %1664 = vperm.xlu0 %1663, %v1661
      %v1665 = vpop.permute.xlu0 %1664
      %1666 = vset.pattern.permute.xlu0 0
      %1667 = vperm.xlu0 %1666, %v1662
      %v1668 = vpop.permute.xlu0 %1667
      %vm1669 = vcmp.eq.s32.totalorder %v1665, 1
      %vm1670 = vcmp.eq.s32.totalorder %v1668, 1
      %v1671 = vsel %vm1669, %v1659, %v1341
      %v1672 = vsel %vm1670, %v1660, %v1342
      %1673 = vst [vmem:[#allocation5] sm:$0xff] %v1671
      %1674 = vst [vmem:[#allocation5 + $0x8] sm:$0xff] %v1672
    $region86: #{tpu_custom_call.1} parent=1 // loop_footer
      %s988 = sadd.s32 %s986, 1
    $region87: #{tpu_custom_call.1} parent=1 // loop_footer_branch
      %985 = sbr.rel target = $region83
    $region88: #{tpu_custom_call.1} parent=1 // loop_exit
      _
    %v1675 = vld [vmem:[#allocation5] sm:$0xff]
    %v1676 = vld [vmem:[#allocation5 + $0x8] sm:$0xff]
    %v1677 = vld [vmem:[#allocation17] sm:$0xff]
    %v1678 = vld [vmem:[#allocation17 + $0x8] sm:$0xff]
    %v1679 = vld [vmem:[#allocation17 + $0x10] sm:$0xff]
    %v1680 = vld [vmem:[#allocation17 + $0x18] sm:$0xff]
    %v1681 = vld [vmem:[#allocation17 + $0x20] sm:$0xff]
    %v1682 = vld [vmem:[#allocation17 + $0x28] sm:$0xff]
    %v1683 = vld [vmem:[#allocation17 + $0x30] sm:$0xff]
    %v1684 = vld [vmem:[#allocation17 + $0x38] sm:$0xff]
    %v1685 = vld [vmem:[#allocation17 + $0x40] sm:$0xff]
    %v1686 = vld [vmem:[#allocation17 + $0x48] sm:$0xff]
    %v1687 = vld [vmem:[#allocation17 + $0x50] sm:$0xff]
    %v1688 = vld [vmem:[#allocation17 + $0x58] sm:$0xff]
    %v1689 = vld [vmem:[#allocation17 + $0x60] sm:$0xff]
    %v1690 = vld [vmem:[#allocation17 + $0x68] sm:$0xff]
    %v1691 = vld [vmem:[#allocation17 + $0x70] sm:$0xff]
    %v1692 = vld [vmem:[#allocation17 + $0x78] sm:$0xff]
    %v1693 = vld [vmem:[#allocation4] sm:$0xff]
    %v1694 = vld [vmem:[#allocation4 + $0x8] sm:$0xff]
    %v1695 = vld [vmem:[#allocation19] sm:$0xff]
    %v1696 = vld [vmem:[#allocation19 + $0x8] sm:$0xff]
    %v1697 = vld [vmem:[#allocation19 + $0x10] sm:$0xff]
    %v1698 = vld [vmem:[#allocation19 + $0x18] sm:$0xff]
    %v1699 = vld [vmem:[#allocation19 + $0x20] sm:$0xff]
    %v1700 = vld [vmem:[#allocation19 + $0x28] sm:$0xff]
    %v1701 = vld [vmem:[#allocation19 + $0x30] sm:$0xff]
    %v1702 = vld [vmem:[#allocation19 + $0x38] sm:$0xff]
    %v1703 = vld [vmem:[#allocation19 + $0x40] sm:$0xff]
    %v1704 = vld [vmem:[#allocation19 + $0x48] sm:$0xff]
    %v1705 = vld [vmem:[#allocation19 + $0x50] sm:$0xff]
    %v1706 = vld [vmem:[#allocation19 + $0x58] sm:$0xff]
    %v1707 = vld [vmem:[#allocation19 + $0x60] sm:$0xff]
    %v1708 = vld [vmem:[#allocation19 + $0x68] sm:$0xff]
    %v1709 = vld [vmem:[#allocation19 + $0x70] sm:$0xff]
    %v1710 = vld [vmem:[#allocation19 + $0x78] sm:$0xff]
    %1711 = vmatpush.msra.mxu0 %v1710
    %1712 = vmatpush.msra.mxu0 %v1709
    %1713 = vmatpush.msra.mxu0 %v1708
    %1714 = vmatpush.msra.mxu0 %v1707
    %1715 = vmatpush.msra.mxu0 %v1706
    %1716 = vmatpush.msra.mxu0 %v1705
    %1717 = vmatpush.msra.mxu0 %v1704
    %1718 = vmatpush.msra.mxu0 %v1703
    %1719 = vmatpush.msra.mxu0 %v1702
    %1720 = vmatpush.msra.mxu0 %v1701
    %1721 = vmatpush.msra.mxu0 %v1700
    %1722 = vmatpush.msra.mxu0 %v1699
    %1723 = vmatpush.msra.mxu0 %v1698
    %1724 = vmatpush.msra.mxu0 %v1697
    %1725 = vmatpush.msra.mxu0 %v1696
    %1726 = vmatpush.msra.mxu0 %v1695
    %1727 = vmatmul.f32.gmra.mxu0 %v1693
    %v1728 = vpop.f32.mrf.mxu0
    %v1729 = vadd.f32 0.0, %v1728
    %1730 = vmatmul.f32.gmra.mxu0 %v1694
    %v1731 = vpop.f32.mrf.mxu0
    %v1732 = vadd.f32 0.0, %v1731
    %1733 = vdwg.mxu0
    %1734 = vmatpush.msra.mxu0 %v1692
    %1735 = vmatpush.msra.mxu0 %v1691
    %1736 = vmatpush.msra.mxu0 %v1690
    %1737 = vmatpush.msra.mxu0 %v1689
    %1738 = vmatpush.msra.mxu0 %v1688
    %1739 = vmatpush.msra.mxu0 %v1687
    %1740 = vmatpush.msra.mxu0 %v1686
    %1741 = vmatpush.msra.mxu0 %v1685
    %1742 = vmatpush.msra.mxu0 %v1684
    %1743 = vmatpush.msra.mxu0 %v1683
    %1744 = vmatpush.msra.mxu0 %v1682
    %1745 = vmatpush.msra.mxu0 %v1681
    %1746 = vmatpush.msra.mxu0 %v1680
    %1747 = vmatpush.msra.mxu0 %v1679
    %1748 = vmatpush.msra.mxu0 %v1678
    %1749 = vmatpush.msra.mxu0 %v1677
    %1750 = vmatmul.f32.gmra.mxu0 %v1675
    %v1751 = vpop.f32.mrf.mxu0
    %v1752 = vadd.f32 %v1729, %v1751
    %1753 = vmatmul.f32.gmra.mxu0 %v1676
    %v1754 = vpop.f32.mrf.mxu0
    %v1755 = vadd.f32 %v1732, %v1754
    %1756 = vdwg.mxu0
    %v1757 = vld [vmem:[%s13] sm:$0x1]
    %v1759 = vperm.slane %v1757, 0
    %v1761 = vadd.f32 %v1752, %v1759
    %v1762 = vadd.f32 %v1755, %v1759
    %1763 = vst [vmem:[#allocation20] sm:$0xff] %v1761
    %1764 = vst [vmem:[#allocation20 + $0x8] sm:$0xff] %v1762
    // Predicated region
    $region89: #{tpu_custom_call.1} parent=1 // pred_check
      _
    $region90: #{tpu_custom_call.1} parent=1 // pred_check_branch
      %1766 = sbr.rel (0) target = $region92
    $region91: #{tpu_custom_call.1} parent=1 // pred_region
      %1768 = vsyncadd [#allocation10], 0
      %s1769 = sshll.u32 [#allocation20], 4
      %s1770 = int_to_ptr.vmem [resolvable:$true] %s1769
      %s1771 = sshll.u32 %s14, 4
      %s1772 = int_to_ptr.hbm [resolvable:$true] %s1771
      %1777 = dma.vmem_to_hbm [thread:$0]  %s1770, 256, %s1772, [#allocation10], 128, 128, 8
    $region92: #{tpu_custom_call.1} parent=1 // pred_fallthru
      _
    // Predicated region
    $region93: #{tpu_custom_call.1} parent=1 // pred_check
      _
    $region94: #{tpu_custom_call.1} parent=1 // pred_check_branch
      %1779 = sbr.rel (0) target = $region96
    $region95: #{tpu_custom_call.1} parent=1 // pred_region
      %1781 = dma.done [#allocation10], 256
    $region96: #{tpu_custom_call.1} parent=1 // pred_fallthru
      _
    %1782 = vsyncpa [#allocation9], 1
    %1783 = vsyncpa [#allocation12], 1
    %1784 = vsyncpa [#allocation15], 1
    %1785 = vsyncpa [#allocation18], 1
    %1786 = vsyncpa [#allocation10], 1

</llo_original>
